<compile_context>
chip_gen: v6e
topology: v6e:2x2x1
jax: 0.10.0
libtpu: 0.0.40
codegen_flags: <defaults>
</compile_context>

<pallas_src>
import functools

import jax
import jax.numpy as jnp
from jax.experimental import pallas as pl
from jax.experimental.pallas import tpu as pltpu

EPS = 1e-5
_MAX_BATCH_TILE = 8


def _round_up(v, m):
    return (v + m - 1) // m * m


def _vmem_limit_bytes():
    """Generation-aware scoped-VMEM limit (v7x: 64 MiB, v5e/v6e: 128 MiB)."""
    cap = 64 * 1024 * 1024                       # conservative default (v7x)
    try:
        cap = int(pltpu.get_tpu_info().vmem_capacity_bytes)
    except Exception:
        pass
    return max(32 * 1024 * 1024, min(3 * cap // 4, 100 * 1024 * 1024))


def _choose_batch_tile(n, per_image_bytes, budget_bytes):
    """Largest divisor of n that fits the VMEM budget and keeps grid >= 2
    (so dimension_semantics=('parallel',) can feed both TensorCores)."""
    best = 1
    for b in range(1, min(n, _MAX_BATCH_TILE) + 1):
        if n % b:
            continue
        if b > 1 and n // b < 2:
            continue
        if b * per_image_bytes > budget_bytes:
            continue
        best = b
    return best


# ---------------------------------------------------------------------------
# Kernel: (optional fused input BN+ReLU6) + 3x3 conv as one im2col matmul
#         + merged per-step sum / sum-of-squares of the raw conv output.
# ---------------------------------------------------------------------------
def _conv3x3_stats_kernel(scale_ref, shift_ref, mask_ref, x_ref, w_ref,
                          z_ref, stats_ref, col_ref,
                          *, width, bn_relu6_input):
    """One batch tile of images per grid step.

    scale_ref, shift_ref : (Cin, 1)  f32  folded BN scale/shift for the input
    mask_ref             : (9, L)    f32  0/1 boundary masks (zero padding)
    x_ref                : (B, Cin, L)    input images, L = H*W (lane dense)
    w_ref                : (Cout, 9*Cin)  bf16 conv weights
    z_ref                : (B, Cout, L)   raw conv output
    stats_ref            : (1, Cout, 2)   per-step [sum, sumsq] of raw output
    col_ref              : (9*Cin, L)     bf16 VMEM im2col scratch (reused)
    """
    b_tile, cin, L = x_ref.shape
    masks = mask_ref[...]                                     # (9, L)

    stats = jnp.zeros(stats_ref.shape[1:], jnp.float32)       # (Cout, 2)
    for b in range(b_tile):                                   # static unroll
        x = x_ref[b].astype(jnp.float32)                      # (Cin, L)
        if bn_relu6_input:
            # Previous layer's BatchNorm (folded scale/shift) + ReLU6.
            x = jnp.clip(x * scale_ref[...] + shift_ref[...], 0.0, 6.0)

        # im2col: 9 lane-rolls (XLU) + boundary masks, stored directly as bf16
        # (halves vst traffic and the scratch size; no extra cast pass).
        for t in range(9):
            dy, dx = divmod(t, 3)
            shift = (dy - 1) * width + (dx - 1)               # source offset
            amount = (-shift) % L
            rolled = pltpu.roll(x, amount, axis=1) if amount else x
            if t != 4:                         # centre tap: mask is all-ones
                rolled = rolled * masks[t:t + 1, :]
            col_ref[t * cin:(t + 1) * cin, :] = rolled.astype(jnp.bfloat16)

        # Single MXU matmul, bf16 in / f32 accumulation:
        #   (Cout, 9*Cin) @ (9*Cin, L) -> (Cout, L), lane-dense.
        z = jnp.dot(w_ref[...], col_ref[...],
                    preferred_element_type=jnp.float32)
        z_ref[b] = z.astype(z_ref.dtype)

        # Partial statistics for this layer's training-mode BatchNorm, taken
        # from the f32 accumulator (independent of the z storage dtype).
        stats = stats + jnp.concatenate(
            [jnp.sum(z, axis=1, keepdims=True),
             jnp.sum(z * z, axis=1, keepdims=True)], axis=1)

    stats_ref[0] = stats


def _conv3x3_stats(x, w_mat, masks, scale, shift, *, width, bn_relu6_input,
                   out_dtype):
    """ConvLayer body: (optional BN+ReLU6 of input) -> 3x3 conv.  Returns raw
    conv output plus merged per-step [sum, sumsq] for this layer's BN."""
    n, cin, L = x.shape
    cout = w_mat.shape[0]

    vmem_limit = _vmem_limit_bytes()
    fixed = (2 * w_mat.size * 2 + 2 * masks.size * 4        # weights + masks
             + 9 * cin * L * 2)                             # bf16 col scratch
    per_image = 2 * L * (cin * x.dtype.itemsize
                         + cout * jnp.dtype(out_dtype).itemsize)
    b_tile = _choose_batch_tile(n, per_image,
                                max(vmem_limit // 2 - fixed, per_image))
    n_steps = n // b_tile

    kernel = functools.partial(_conv3x3_stats_kernel, width=width,
                               bn_relu6_input=bn_relu6_input)
    return pl.pallas_call(
        kernel,
        grid=(n_steps,),
        in_specs=[
            pl.BlockSpec((cin, 1), lambda i: (0, 0)),             # scale
            pl.BlockSpec((cin, 1), lambda i: (0, 0)),             # shift
            pl.BlockSpec((9, L), lambda i: (0, 0)),               # masks
            pl.BlockSpec((b_tile, cin, L), lambda i: (i, 0, 0)),  # x tile
            pl.BlockSpec((cout, 9 * cin), lambda i: (0, 0)),      # weights
        ],
        out_specs=(
            pl.BlockSpec((b_tile, cout, L), lambda i: (i, 0, 0)),  # conv out
            pl.BlockSpec((1, cout, 2), lambda i: (i, 0, 0)),       # stats
        ),
        out_shape=(
            jax.ShapeDtypeStruct((n, cout, L), out_dtype),
            jax.ShapeDtypeStruct((n_steps, cout, 2), jnp.float32),
        ),
        scratch_shapes=[pltpu.VMEM((9 * cin, L), jnp.bfloat16)],
        compiler_params=pltpu.CompilerParams(
            dimension_semantics=("parallel",),
            vmem_limit_bytes=vmem_limit,
        ),
    )(scale, shift, masks, x, w_mat)


# ---------------------------------------------------------------------------
# Kernel: final BatchNorm (folded scale/shift), tiled elementwise.
# ---------------------------------------------------------------------------
def _affine_kernel(scale_ref, shift_ref, z_ref, y_ref):
    cout = y_ref.shape[1]
    y_ref[...] = (z_ref[:, :cout, :].astype(jnp.float32)
                  * scale_ref[...] + shift_ref[...])


def _apply_bn(z, scale, shift):
    n, cout_p, L = z.shape
    cout = scale.shape[0]

    vmem_limit = _vmem_limit_bytes()
    per_image = 2 * L * 4 * (cout_p + cout)                  # dbl-buffered io
    b_tile = _choose_batch_tile(n, per_image, max(vmem_limit // 2, per_image))
    n_steps = n // b_tile

    # Write in place over z when there is no channel padding to strip.
    alias = {2: 0} if (cout == cout_p and z.dtype == jnp.float32) else {}
    return pl.pallas_call(
        _affine_kernel,
        grid=(n_steps,),
        in_specs=[
            pl.BlockSpec((cout, 1), lambda i: (0, 0)),
            pl.BlockSpec((cout, 1), lambda i: (0, 0)),
            pl.BlockSpec((b_tile, cout_p, L), lambda i: (i, 0, 0)),
        ],
        out_specs=pl.BlockSpec((b_tile, cout, L), lambda i: (i, 0, 0)),
        out_shape=jax.ShapeDtypeStruct((n, cout, L), jnp.float32),
        input_output_aliases=alias,
        compiler_params=pltpu.CompilerParams(
            dimension_semantics=("parallel",),
            vmem_limit_bytes=vmem_limit,
        ),
    )(scale, shift, z)


# ---------------------------------------------------------------------------
# Small host-side glue (tiny (C,)-sized math, free reshapes).
# ---------------------------------------------------------------------------
def _bn_scale_shift(stats, gamma, beta, count, c_pad):
    """Fold training-mode BN (batch stats, biased variance) to scale/shift."""
    # TODO(synk): single-pass E[x^2]-E[x]^2 in f32 can cancel for very large
    # N*H*W; subtract a per-step shift before accumulating if that bites.
    tot = jnp.sum(stats, axis=0)                             # (C, 2)
    mean = tot[:, 0] / count
    var = jnp.maximum(tot[:, 1] / count - mean * mean, 0.0)
    inv = jax.lax.rsqrt(var + EPS)
    c = gamma.shape[0]
    g = jnp.pad(gamma.astype(jnp.float32), (0, c_pad - c), constant_values=1.0)
    b = jnp.pad(beta.astype(jnp.float32), (0, c_pad - c))
    scale = g * inv
    shift = b - mean * scale
    return scale.reshape(c_pad, 1), shift.reshape(c_pad, 1)


def _boundary_masks(h, w):
    """(9, H*W) 0/1 masks: which output positions have a valid in-image source
    for each tap.  Masked-out positions are exactly the SAME zero padding."""
    hh = jnp.arange(h)
    ww = jnp.arange(w)
    rows = []
    for t in range(9):
        dy, dx = divmod(t, 3)
        dy -= 1
        dx -= 1
        mh = ((hh + dy >= 0) & (hh + dy < h)).astype(jnp.float32)
        mw = ((ww + dx >= 0) & (ww + dx < w)).astype(jnp.float32)
        rows.append(jnp.outer(mh, mw).reshape(-1))
    return jnp.stack(rows)                                   # (9, H*W) f32


def _prep_weight(w_hwio, cin_pad, cout_pad):
    """HWIO (3,3,Cin,Cout) -> zero-padded (Cout_p, 9*Cin_p) bf16 for the MXU."""
    kh, kw, cin, cout = w_hwio.shape
    wp = jnp.pad(w_hwio.astype(jnp.float32),
                 ((0, 0), (0, 0), (0, cin_pad - cin), (0, cout_pad - cout)))
    return wp.reshape(kh * kw * cin_pad, cout_pad).T.astype(jnp.bfloat16)


def resblock_forward(x_nchw, params):
    """ResBlock.forward: conv1(+BN+ReLU6) -> conv2(+BN).  NCHW in / NCHW out."""
    # TODO(synk): only the ResBlock defaults (kernel_size=3, stride=1,
    # dilation=1, groups=1, dropout=0) are implemented; very large single
    # images would additionally need row tiling with halos per step.
    n, cin, h, w = x_nchw.shape
    L = h * w
    cmid = params["w1"].shape[-1]
    cout = params["w2"].shape[-1]

    # Pad channel counts so bf16 im2col tap stores are tile-aligned.  Padded
    # weight rows/cols are zero, so results are exact (no-op for real nets).
    cin_p = _round_up(cin, 16)
    cmid_p = _round_up(cmid, 16)
    cout_p = _round_up(cout, 8)

    x = x_nchw.reshape(n, cin, L).astype(jnp.float32)        # free reshape
    if cin_p != cin:
        x = jnp.pad(x, ((0, 0), (0, cin_p - cin), (0, 0)))

    w1 = _prep_weight(params["w1"], cin_p, cmid_p)
    w2 = _prep_weight(params["w2"], cmid_p, cout_p)
    masks = _boundary_masks(h, w)
    count = float(n * h * w)

    ones = jnp.ones((cin_p, 1), jnp.float32)
    zeros = jnp.zeros((cin_p, 1), jnp.float32)

    # Layer 1: raw conv (bf16 intermediate, halves HBM traffic) + BN1 stats.
    z1, st1 = _conv3x3_stats(x, w1, masks, ones, zeros, width=w,
                             bn_relu6_input=False, out_dtype=jnp.bfloat16)
    scale1, shift1 = _bn_scale_shift(st1, params["g1"], params["b1"],
                                     count, cmid_p)

    # Layer 2: BN1+ReLU6 fused onto the input path, conv2, BN2 statistics.
    z2, st2 = _conv3x3_stats(z1, w2, masks, scale1, shift1, width=w,
                             bn_relu6_input=True, out_dtype=jnp.float32)
    scale2, shift2 = _bn_scale_shift(st2, params["g2"], params["b2"],
                                     count, cout_p)

    # Final BatchNorm (no activation), lane-dense batch-tiled elementwise.
    y = _apply_bn(z2, scale2[:cout], shift2[:cout])
    return y.reshape(n, cout, h, w)


# ---------------- pure-JAX reference (for correctness check) ----------------
# Matches the kernel's precision choices: bf16 conv inputs with f32
# accumulation and bf16 storage of the intermediate activation; BN statistics
# always taken from the f32 conv accumulator.
def _ref_resblock(x, p):
    def conv(inp, w_hwio):
        return jax.lax.conv_general_dilated(
            inp.astype(jnp.bfloat16), w_hwio.astype(jnp.bfloat16),
            window_strides=(1, 1), padding="SAME",
            dimension_numbers=("NCHW", "HWIO", "NCHW"),
            preferred_element_type=jnp.float32)

    def bn_stats(z):
        mean = z.mean(axis=(0, 2, 3), keepdims=True)
        var = ((z - mean) ** 2).mean(axis=(0, 2, 3), keepdims=True)
        return mean, var

    z1 = conv(x, p["w1"])
    mean1, var1 = bn_stats(z1)                               # f32 statistics
    z1 = z1.astype(jnp.bfloat16).astype(jnp.float32)         # bf16 storage
    h = (z1 - mean1) * jax.lax.rsqrt(var1 + EPS)
    h = h * p["g1"].reshape(1, -1, 1, 1) + p["b1"].reshape(1, -1, 1, 1)
    h = jnp.clip(h, 0.0, 6.0)

    z2 = conv(h, p["w2"])
    mean2, var2 = bn_stats(z2)
    y = (z2 - mean2) * jax.lax.rsqrt(var2 + EPS)
    return y * p["g2"].reshape(1, -1, 1, 1) + p["b2"].reshape(1, -1, 1, 1)


if __name__ == "__main__":
    # ResBlock(in_channels=4, out_channels=4), default expand_ratio=1 -> mid=4.
    N, Cin, H, W = 2, 4, 16, 16
    Cmid, Cout = 4, 4

    ks = jax.random.split(jax.random.PRNGKey(0), 7)
    params = {
        "w1": 0.2 * jax.random.normal(ks[0], (3, 3, Cin, Cmid), jnp.float32),
        "g1": 1.0 + 0.1 * jax.random.normal(ks[1], (Cmid,), jnp.float32),
        "b1": 0.1 * jax.random.normal(ks[2], (Cmid,), jnp.float32),
        "w2": 0.2 * jax.random.normal(ks[3], (3, 3, Cmid, Cout), jnp.float32),
        "g2": 1.0 + 0.1 * jax.random.normal(ks[4], (Cout,), jnp.float32),
        "b2": 0.1 * jax.random.normal(ks[5], (Cout,), jnp.float32),
    }
    x = jax.random.normal(ks[6], (N, Cin, H, W), jnp.float32)

    out = jax.block_until_ready(jax.jit(resblock_forward)(x, params))
    ref = jax.block_until_ready(_ref_resblock(x, params))

    assert out.shape == (N, Cout, H, W), out.shape
    max_err = float(jnp.max(jnp.abs(out - ref)))
    assert max_err < 1e-2, f"max abs err {max_err}"

    print("KERNEL_OK")
</pallas_src>

<mosaic_0001>
module attributes {stable_mosaic.version = 11 : i64} {
  func.func @_conv3x3_stats_kernel(%arg0: i32, %arg1: memref<16x1xf32, #tpu.memory_space<vmem>>, %arg2: memref<16x1xf32, #tpu.memory_space<vmem>>, %arg3: memref<9x256xf32, #tpu.memory_space<vmem>>, %arg4: memref<1x16x256xf32, #tpu.memory_space<vmem>>, %arg5: memref<16x144xbf16, #tpu.memory_space<vmem>>, %arg6: memref<1x16x256xbf16, #tpu.memory_space<vmem>>, %arg7: memref<1x16x2xf32, #tpu.memory_space<vmem>>, %arg8: memref<144x256xbf16, #tpu.memory_space<vmem>>) attributes {dimension_semantics = [#tpu.dimension_semantics<parallel>], iteration_bounds = array<i64: 2>, scalar_prefetch = 0 : i64, scratch_operands = 1 : i64, tpu.core_type = #tpu.core_type<tc>, window_params = [{pipeline_mode = #tpu.pipeline_mode<synchronous>, transform_indices = @transform_0, window_bounds = array<i64: 16, 1>}, {pipeline_mode = #tpu.pipeline_mode<synchronous>, transform_indices = @transform_1, window_bounds = array<i64: 16, 1>}, {pipeline_mode = #tpu.pipeline_mode<synchronous>, transform_indices = @transform_2, window_bounds = array<i64: 9, 256>}, {transform_indices = @transform_3, window_bounds = array<i64: 1, 16, 256>}, {pipeline_mode = #tpu.pipeline_mode<synchronous>, transform_indices = @transform_4, window_bounds = array<i64: 16, 144>}, {transform_indices = @transform_5, window_bounds = array<i64: 1, 16, 256>}, {transform_indices = @transform_6, window_bounds = array<i64: 1, 16, 2>}]} {
    %c0 = arith.constant 0 : index
    %c0_0 = arith.constant 0 : index
    %0 = vector.load %arg3[%c0, %c0_0] : memref<9x256xf32, #tpu.memory_space<vmem>>, vector<9x256xf32>
    %cst = arith.constant 0.000000e+00 : f32
    %1 = vector.broadcast %cst : f32 to vector<16x2xf32>
    %c0_1 = arith.constant 0 : index
    %c0_2 = arith.constant 0 : index
    %c0_3 = arith.constant 0 : index
    %2 = vector.load %arg4[%c0_1, %c0_2, %c0_3] : memref<1x16x256xf32, #tpu.memory_space<vmem>>, vector<1x16x256xf32>
    %3 = vector.shape_cast %2 : vector<1x16x256xf32> to vector<16x256xf32>
    %c17_i32 = arith.constant 17 : i32
    %4 = tpu.dynamic_rotate %3 by %c17_i32 dim 1 : vector<16x256xf32>, i32 -> vector<16x256xf32>
    %5 = vector.extract_strided_slice %0 {offsets = [0, 0], sizes = [1, 256], strides = [1, 1]} : vector<9x256xf32> to vector<1x256xf32>
    %6 = vector.broadcast %5 : vector<1x256xf32> to vector<16x256xf32>
    %7 = arith.mulf %4, %6 : vector<16x256xf32>
    %8 = arith.truncf %7 : vector<16x256xf32> to vector<16x256xbf16>
    %c0_4 = arith.constant 0 : index
    %c0_5 = arith.constant 0 : index
    %9 = vector.load %arg8[%c0_4, %c0_5] : memref<144x256xbf16, #tpu.memory_space<vmem>>, vector<16x256xbf16>
    tpu.vector_store %arg8[%c0_4, %c0_5], %8 {strides = array<i32>} : memref<144x256xbf16, #tpu.memory_space<vmem>>, vector<16x256xbf16>,
    %c16_i32 = arith.constant 16 : i32
    %10 = tpu.dynamic_rotate %3 by %c16_i32 dim 1 : vector<16x256xf32>, i32 -> vector<16x256xf32>
    %11 = vector.extract_strided_slice %0 {offsets = [1, 0], sizes = [1, 256], strides = [1, 1]} : vector<9x256xf32> to vector<1x256xf32>
    %12 = vector.broadcast %11 : vector<1x256xf32> to vector<16x256xf32>
    %13 = arith.mulf %10, %12 : vector<16x256xf32>
    %14 = arith.truncf %13 : vector<16x256xf32> to vector<16x256xbf16>
    %c16 = arith.constant 16 : index
    %c0_6 = arith.constant 0 : index
    %15 = vector.load %arg8[%c16, %c0_6] : memref<144x256xbf16, #tpu.memory_space<vmem>>, vector<16x256xbf16>
    tpu.vector_store %arg8[%c16, %c0_6], %14 {strides = array<i32>} : memref<144x256xbf16, #tpu.memory_space<vmem>>, vector<16x256xbf16>,
    %c15_i32 = arith.constant 15 : i32
    %16 = tpu.dynamic_rotate %3 by %c15_i32 dim 1 : vector<16x256xf32>, i32 -> vector<16x256xf32>
    %17 = vector.extract_strided_slice %0 {offsets = [2, 0], sizes = [1, 256], strides = [1, 1]} : vector<9x256xf32> to vector<1x256xf32>
    %18 = vector.broadcast %17 : vector<1x256xf32> to vector<16x256xf32>
    %19 = arith.mulf %16, %18 : vector<16x256xf32>
    %20 = arith.truncf %19 : vector<16x256xf32> to vector<16x256xbf16>
    %c32 = arith.constant 32 : index
    %c0_7 = arith.constant 0 : index
    %21 = vector.load %arg8[%c32, %c0_7] : memref<144x256xbf16, #tpu.memory_space<vmem>>, vector<16x256xbf16>
    tpu.vector_store %arg8[%c32, %c0_7], %20 {strides = array<i32>} : memref<144x256xbf16, #tpu.memory_space<vmem>>, vector<16x256xbf16>,
    %c1_i32 = arith.constant 1 : i32
    %22 = tpu.dynamic_rotate %3 by %c1_i32 dim 1 : vector<16x256xf32>, i32 -> vector<16x256xf32>
    %23 = vector.extract_strided_slice %0 {offsets = [3, 0], sizes = [1, 256], strides = [1, 1]} : vector<9x256xf32> to vector<1x256xf32>
    %24 = vector.broadcast %23 : vector<1x256xf32> to vector<16x256xf32>
    %25 = arith.mulf %22, %24 : vector<16x256xf32>
    %26 = arith.truncf %25 : vector<16x256xf32> to vector<16x256xbf16>
    %c48 = arith.constant 48 : index
    %c0_8 = arith.constant 0 : index
    %27 = vector.load %arg8[%c48, %c0_8] : memref<144x256xbf16, #tpu.memory_space<vmem>>, vector<16x256xbf16>
    tpu.vector_store %arg8[%c48, %c0_8], %26 {strides = array<i32>} : memref<144x256xbf16, #tpu.memory_space<vmem>>, vector<16x256xbf16>,
    %28 = arith.truncf %3 : vector<16x256xf32> to vector<16x256xbf16>
    %c64 = arith.constant 64 : index
    %c0_9 = arith.constant 0 : index
    %29 = vector.load %arg8[%c64, %c0_9] : memref<144x256xbf16, #tpu.memory_space<vmem>>, vector<16x256xbf16>
    tpu.vector_store %arg8[%c64, %c0_9], %28 {strides = array<i32>} : memref<144x256xbf16, #tpu.memory_space<vmem>>, vector<16x256xbf16>,
    %c255_i32 = arith.constant 255 : i32
    %30 = tpu.dynamic_rotate %3 by %c255_i32 dim 1 : vector<16x256xf32>, i32 -> vector<16x256xf32>
    %31 = vector.extract_strided_slice %0 {offsets = [5, 0], sizes = [1, 256], strides = [1, 1]} : vector<9x256xf32> to vector<1x256xf32>
    %32 = vector.broadcast %31 : vector<1x256xf32> to vector<16x256xf32>
    %33 = arith.mulf %30, %32 : vector<16x256xf32>
    %34 = arith.truncf %33 : vector<16x256xf32> to vector<16x256xbf16>
    %c80 = arith.constant 80 : index
    %c0_10 = arith.constant 0 : index
    %35 = vector.load %arg8[%c80, %c0_10] : memref<144x256xbf16, #tpu.memory_space<vmem>>, vector<16x256xbf16>
    tpu.vector_store %arg8[%c80, %c0_10], %34 {strides = array<i32>} : memref<144x256xbf16, #tpu.memory_space<vmem>>, vector<16x256xbf16>,
    %c241_i32 = arith.constant 241 : i32
    %36 = tpu.dynamic_rotate %3 by %c241_i32 dim 1 : vector<16x256xf32>, i32 -> vector<16x256xf32>
    %37 = vector.extract_strided_slice %0 {offsets = [6, 0], sizes = [1, 256], strides = [1, 1]} : vector<9x256xf32> to vector<1x256xf32>
    %38 = vector.broadcast %37 : vector<1x256xf32> to vector<16x256xf32>
    %39 = arith.mulf %36, %38 : vector<16x256xf32>
    %40 = arith.truncf %39 : vector<16x256xf32> to vector<16x256xbf16>
    %c96 = arith.constant 96 : index
    %c0_11 = arith.constant 0 : index
    %41 = vector.load %arg8[%c96, %c0_11] : memref<144x256xbf16, #tpu.memory_space<vmem>>, vector<16x256xbf16>
    tpu.vector_store %arg8[%c96, %c0_11], %40 {strides = array<i32>} : memref<144x256xbf16, #tpu.memory_space<vmem>>, vector<16x256xbf16>,
    %c240_i32 = arith.constant 240 : i32
    %42 = tpu.dynamic_rotate %3 by %c240_i32 dim 1 : vector<16x256xf32>, i32 -> vector<16x256xf32>
    %43 = vector.extract_strided_slice %0 {offsets = [7, 0], sizes = [1, 256], strides = [1, 1]} : vector<9x256xf32> to vector<1x256xf32>
    %44 = vector.broadcast %43 : vector<1x256xf32> to vector<16x256xf32>
    %45 = arith.mulf %42, %44 : vector<16x256xf32>
    %46 = arith.truncf %45 : vector<16x256xf32> to vector<16x256xbf16>
    %c112 = arith.constant 112 : index
    %c0_12 = arith.constant 0 : index
    %47 = vector.load %arg8[%c112, %c0_12] : memref<144x256xbf16, #tpu.memory_space<vmem>>, vector<16x256xbf16>
    tpu.vector_store %arg8[%c112, %c0_12], %46 {strides = array<i32>} : memref<144x256xbf16, #tpu.memory_space<vmem>>, vector<16x256xbf16>,
    %c239_i32 = arith.constant 239 : i32
    %48 = tpu.dynamic_rotate %3 by %c239_i32 dim 1 : vector<16x256xf32>, i32 -> vector<16x256xf32>
    %49 = vector.extract_strided_slice %0 {offsets = [8, 0], sizes = [1, 256], strides = [1, 1]} : vector<9x256xf32> to vector<1x256xf32>
    %50 = vector.broadcast %49 : vector<1x256xf32> to vector<16x256xf32>
    %51 = arith.mulf %48, %50 : vector<16x256xf32>
    %52 = arith.truncf %51 : vector<16x256xf32> to vector<16x256xbf16>
    %c128 = arith.constant 128 : index
    %c0_13 = arith.constant 0 : index
    %53 = vector.load %arg8[%c128, %c0_13] : memref<144x256xbf16, #tpu.memory_space<vmem>>, vector<16x256xbf16>
    tpu.vector_store %arg8[%c128, %c0_13], %52 {strides = array<i32>} : memref<144x256xbf16, #tpu.memory_space<vmem>>, vector<16x256xbf16>,
    %c0_14 = arith.constant 0 : index
    %c0_15 = arith.constant 0 : index
    %54 = vector.load %arg5[%c0_14, %c0_15] : memref<16x144xbf16, #tpu.memory_space<vmem>>, vector<16x144xbf16>
    %c0_16 = arith.constant 0 : index
    %c0_17 = arith.constant 0 : index
    %55 = vector.load %arg8[%c0_16, %c0_17] : memref<144x256xbf16, #tpu.memory_space<vmem>>, vector<144x256xbf16>
    %cst_18 = arith.constant dense<0.000000e+00> : vector<16x256xf32>
    %56 = tpu.matmul %54, %55, %cst_18 {dimension_numbers = #tpu.dot_dimension_numbers<[1], [0], [0], [1], [0, 0, 1, 1], [], []>} : vector<16x144xbf16>, vector<144x256xbf16>, vector<16x256xf32> -> vector<16x256xf32>
    %57 = arith.truncf %56 : vector<16x256xf32> to vector<16x256xbf16>
    %c0_19 = arith.constant 0 : index
    %c0_20 = arith.constant 0 : index
    %c0_21 = arith.constant 0 : index
    %58 = vector.load %arg6[%c0_19, %c0_20, %c0_21] : memref<1x16x256xbf16, #tpu.memory_space<vmem>>, vector<1x16x256xbf16>
    %59 = vector.shape_cast %58 : vector<1x16x256xbf16> to vector<16x256xbf16>
    %60 = vector.shape_cast %57 : vector<16x256xbf16> to vector<1x16x256xbf16>
    tpu.vector_store %arg6[%c0_19, %c0_20, %c0_21], %60 {strides = array<i32>} : memref<1x16x256xbf16, #tpu.memory_space<vmem>>, vector<1x16x256xbf16>,
    %cst_22 = arith.constant dense<0.000000e+00> : vector<16xf32>
    %61 = vector.multi_reduction <add>, %56, %cst_22 [1] : vector<16x256xf32> to vector<16xf32>
    %62 = vector.shape_cast %61 : vector<16xf32> to vector<16x1xf32>
    %63 = arith.mulf %56, %56 : vector<16x256xf32>
    %cst_23 = arith.constant dense<0.000000e+00> : vector<16xf32>
    %64 = vector.multi_reduction <add>, %63, %cst_23 [1] : vector<16x256xf32> to vector<16xf32>
    %65 = vector.shape_cast %64 : vector<16xf32> to vector<16x1xf32>
    %66 = tpu.concatenate %62, %65 in 1 : vector<16x1xf32>, vector<16x1xf32> -> vector<16x2xf32>
    %67 = arith.addf %1, %66 : vector<16x2xf32>
    %c0_24 = arith.constant 0 : index
    %c0_25 = arith.constant 0 : index
    %c0_26 = arith.constant 0 : index
    %68 = vector.load %arg7[%c0_24, %c0_25, %c0_26] : memref<1x16x2xf32, #tpu.memory_space<vmem>>, vector<1x16x2xf32>
    %69 = vector.shape_cast %68 : vector<1x16x2xf32> to vector<16x2xf32>
    %70 = vector.shape_cast %67 : vector<16x2xf32> to vector<1x16x2xf32>
    tpu.vector_store %arg7[%c0_24, %c0_25, %c0_26], %70 {strides = array<i32>} : memref<1x16x2xf32, #tpu.memory_space<vmem>>, vector<1x16x2xf32>,
    return
  }
  func.func @transform_0(%arg0: i32) -> (i32, i32) {
    %c0_i32 = arith.constant 0 : i32
    %c0_i32_0 = arith.constant 0 : i32
    %c0_i32_1 = arith.constant 0 : i32
    return %c0_i32, %c0_i32_0 : i32, i32
  }
  func.func @transform_1(%arg0: i32) -> (i32, i32) {
    %c0_i32 = arith.constant 0 : i32
    %c0_i32_0 = arith.constant 0 : i32
    %c0_i32_1 = arith.constant 0 : i32
    return %c0_i32, %c0_i32_0 : i32, i32
  }
  func.func @transform_2(%arg0: i32) -> (i32, i32) {
    %c0_i32 = arith.constant 0 : i32
    %c0_i32_0 = arith.constant 0 : i32
    %c0_i32_1 = arith.constant 0 : i32
    return %c0_i32, %c0_i32_0 : i32, i32
  }
  func.func @transform_3(%arg0: i32) -> (i32, i32, i32) {
    %c0_i32 = arith.constant 0 : i32
    %c0_i32_0 = arith.constant 0 : i32
    %c0_i32_1 = arith.constant 0 : i32
    return %arg0, %c0_i32, %c0_i32_0 : i32, i32, i32
  }
  func.func @transform_4(%arg0: i32) -> (i32, i32) {
    %c0_i32 = arith.constant 0 : i32
    %c0_i32_0 = arith.constant 0 : i32
    %c0_i32_1 = arith.constant 0 : i32
    return %c0_i32, %c0_i32_0 : i32, i32
  }
  func.func @transform_5(%arg0: i32) -> (i32, i32, i32) {
    %c0_i32 = arith.constant 0 : i32
    %c0_i32_0 = arith.constant 0 : i32
    %c0_i32_1 = arith.constant 0 : i32
    return %arg0, %c0_i32, %c0_i32_0 : i32, i32, i32
  }
  func.func @transform_6(%arg0: i32) -> (i32, i32, i32) {
    %c0_i32 = arith.constant 0 : i32
    %c0_i32_0 = arith.constant 0 : i32
    %c0_i32_1 = arith.constant 0 : i32
    return %arg0, %c0_i32, %c0_i32_0 : i32, i32, i32
  }
}

module attributes {stable_mosaic.version = 11 : i64} {
  func.func @_conv3x3_stats_kernel(%arg0: i32, %arg1: memref<16x1xf32, #tpu.memory_space<vmem>>, %arg2: memref<16x1xf32, #tpu.memory_space<vmem>>, %arg3: memref<9x256xf32, #tpu.memory_space<vmem>>, %arg4: memref<1x16x256xbf16, #tpu.memory_space<vmem>>, %arg5: memref<8x144xbf16, #tpu.memory_space<vmem>>, %arg6: memref<1x8x256xf32, #tpu.memory_space<vmem>>, %arg7: memref<1x8x2xf32, #tpu.memory_space<vmem>>, %arg8: memref<144x256xbf16, #tpu.memory_space<vmem>>) attributes {dimension_semantics = [#tpu.dimension_semantics<parallel>], iteration_bounds = array<i64: 2>, scalar_prefetch = 0 : i64, scratch_operands = 1 : i64, tpu.core_type = #tpu.core_type<tc>, window_params = [{pipeline_mode = #tpu.pipeline_mode<synchronous>, transform_indices = @transform_0, window_bounds = array<i64: 16, 1>}, {pipeline_mode = #tpu.pipeline_mode<synchronous>, transform_indices = @transform_1, window_bounds = array<i64: 16, 1>}, {pipeline_mode = #tpu.pipeline_mode<synchronous>, transform_indices = @transform_2, window_bounds = array<i64: 9, 256>}, {transform_indices = @transform_3, window_bounds = array<i64: 1, 16, 256>}, {pipeline_mode = #tpu.pipeline_mode<synchronous>, transform_indices = @transform_4, window_bounds = array<i64: 8, 144>}, {transform_indices = @transform_5, window_bounds = array<i64: 1, 8, 256>}, {transform_indices = @transform_6, window_bounds = array<i64: 1, 8, 2>}]} {
    %c0 = arith.constant 0 : index
    %c0_0 = arith.constant 0 : index
    %0 = vector.load %arg3[%c0, %c0_0] : memref<9x256xf32, #tpu.memory_space<vmem>>, vector<9x256xf32>
    %cst = arith.constant 0.000000e+00 : f32
    %1 = vector.broadcast %cst : f32 to vector<8x2xf32>
    %c0_1 = arith.constant 0 : index
    %c0_2 = arith.constant 0 : index
    %c0_3 = arith.constant 0 : index
    %2 = vector.load %arg4[%c0_1, %c0_2, %c0_3] : memref<1x16x256xbf16, #tpu.memory_space<vmem>>, vector<1x16x256xbf16>
    %3 = vector.shape_cast %2 : vector<1x16x256xbf16> to vector<16x256xbf16>
    %4 = arith.extf %3 : vector<16x256xbf16> to vector<16x256xf32>
    %c0_4 = arith.constant 0 : index
    %c0_5 = arith.constant 0 : index
    %5 = vector.load %arg1[%c0_4, %c0_5] : memref<16x1xf32, #tpu.memory_space<vmem>>, vector<16x1xf32>
    %6 = vector.broadcast %5 : vector<16x1xf32> to vector<16x256xf32>
    %7 = arith.mulf %4, %6 : vector<16x256xf32>
    %c0_6 = arith.constant 0 : index
    %c0_7 = arith.constant 0 : index
    %8 = vector.load %arg2[%c0_6, %c0_7] : memref<16x1xf32, #tpu.memory_space<vmem>>, vector<16x1xf32>
    %9 = vector.broadcast %8 : vector<16x1xf32> to vector<16x256xf32>
    %10 = arith.addf %7, %9 : vector<16x256xf32>
    %cst_8 = arith.constant 0.000000e+00 : f32
    %cst_9 = arith.constant 6.000000e+00 : f32
    %11 = vector.broadcast %cst_8 : f32 to vector<16x256xf32>
    %12 = arith.maximumf %11, %10 : vector<16x256xf32>
    %13 = vector.broadcast %cst_9 : f32 to vector<16x256xf32>
    %14 = arith.minimumf %13, %12 : vector<16x256xf32>
    %c17_i32 = arith.constant 17 : i32
    %15 = tpu.dynamic_rotate %14 by %c17_i32 dim 1 : vector<16x256xf32>, i32 -> vector<16x256xf32>
    %16 = vector.extract_strided_slice %0 {offsets = [0, 0], sizes = [1, 256], strides = [1, 1]} : vector<9x256xf32> to vector<1x256xf32>
    %17 = vector.broadcast %16 : vector<1x256xf32> to vector<16x256xf32>
    %18 = arith.mulf %15, %17 : vector<16x256xf32>
    %19 = arith.truncf %18 : vector<16x256xf32> to vector<16x256xbf16>
    %c0_10 = arith.constant 0 : index
    %c0_11 = arith.constant 0 : index
    %20 = vector.load %arg8[%c0_10, %c0_11] : memref<144x256xbf16, #tpu.memory_space<vmem>>, vector<16x256xbf16>
    tpu.vector_store %arg8[%c0_10, %c0_11], %19 {strides = array<i32>} : memref<144x256xbf16, #tpu.memory_space<vmem>>, vector<16x256xbf16>,
    %c16_i32 = arith.constant 16 : i32
    %21 = tpu.dynamic_rotate %14 by %c16_i32 dim 1 : vector<16x256xf32>, i32 -> vector<16x256xf32>
    %22 = vector.extract_strided_slice %0 {offsets = [1, 0], sizes = [1, 256], strides = [1, 1]} : vector<9x256xf32> to vector<1x256xf32>
    %23 = vector.broadcast %22 : vector<1x256xf32> to vector<16x256xf32>
    %24 = arith.mulf %21, %23 : vector<16x256xf32>
    %25 = arith.truncf %24 : vector<16x256xf32> to vector<16x256xbf16>
    %c16 = arith.constant 16 : index
    %c0_12 = arith.constant 0 : index
    %26 = vector.load %arg8[%c16, %c0_12] : memref<144x256xbf16, #tpu.memory_space<vmem>>, vector<16x256xbf16>
    tpu.vector_store %arg8[%c16, %c0_12], %25 {strides = array<i32>} : memref<144x256xbf16, #tpu.memory_space<vmem>>, vector<16x256xbf16>,
    %c15_i32 = arith.constant 15 : i32
    %27 = tpu.dynamic_rotate %14 by %c15_i32 dim 1 : vector<16x256xf32>, i32 -> vector<16x256xf32>
    %28 = vector.extract_strided_slice %0 {offsets = [2, 0], sizes = [1, 256], strides = [1, 1]} : vector<9x256xf32> to vector<1x256xf32>
    %29 = vector.broadcast %28 : vector<1x256xf32> to vector<16x256xf32>
    %30 = arith.mulf %27, %29 : vector<16x256xf32>
    %31 = arith.truncf %30 : vector<16x256xf32> to vector<16x256xbf16>
    %c32 = arith.constant 32 : index
    %c0_13 = arith.constant 0 : index
    %32 = vector.load %arg8[%c32, %c0_13] : memref<144x256xbf16, #tpu.memory_space<vmem>>, vector<16x256xbf16>
    tpu.vector_store %arg8[%c32, %c0_13], %31 {strides = array<i32>} : memref<144x256xbf16, #tpu.memory_space<vmem>>, vector<16x256xbf16>,
    %c1_i32 = arith.constant 1 : i32
    %33 = tpu.dynamic_rotate %14 by %c1_i32 dim 1 : vector<16x256xf32>, i32 -> vector<16x256xf32>
    %34 = vector.extract_strided_slice %0 {offsets = [3, 0], sizes = [1, 256], strides = [1, 1]} : vector<9x256xf32> to vector<1x256xf32>
    %35 = vector.broadcast %34 : vector<1x256xf32> to vector<16x256xf32>
    %36 = arith.mulf %33, %35 : vector<16x256xf32>
    %37 = arith.truncf %36 : vector<16x256xf32> to vector<16x256xbf16>
    %c48 = arith.constant 48 : index
    %c0_14 = arith.constant 0 : index
    %38 = vector.load %arg8[%c48, %c0_14] : memref<144x256xbf16, #tpu.memory_space<vmem>>, vector<16x256xbf16>
    tpu.vector_store %arg8[%c48, %c0_14], %37 {strides = array<i32>} : memref<144x256xbf16, #tpu.memory_space<vmem>>, vector<16x256xbf16>,
    %39 = arith.truncf %14 : vector<16x256xf32> to vector<16x256xbf16>
    %c64 = arith.constant 64 : index
    %c0_15 = arith.constant 0 : index
    %40 = vector.load %arg8[%c64, %c0_15] : memref<144x256xbf16, #tpu.memory_space<vmem>>, vector<16x256xbf16>
    tpu.vector_store %arg8[%c64, %c0_15], %39 {strides = array<i32>} : memref<144x256xbf16, #tpu.memory_space<vmem>>, vector<16x256xbf16>,
    %c255_i32 = arith.constant 255 : i32
    %41 = tpu.dynamic_rotate %14 by %c255_i32 dim 1 : vector<16x256xf32>, i32 -> vector<16x256xf32>
    %42 = vector.extract_strided_slice %0 {offsets = [5, 0], sizes = [1, 256], strides = [1, 1]} : vector<9x256xf32> to vector<1x256xf32>
    %43 = vector.broadcast %42 : vector<1x256xf32> to vector<16x256xf32>
    %44 = arith.mulf %41, %43 : vector<16x256xf32>
    %45 = arith.truncf %44 : vector<16x256xf32> to vector<16x256xbf16>
    %c80 = arith.constant 80 : index
    %c0_16 = arith.constant 0 : index
    %46 = vector.load %arg8[%c80, %c0_16] : memref<144x256xbf16, #tpu.memory_space<vmem>>, vector<16x256xbf16>
    tpu.vector_store %arg8[%c80, %c0_16], %45 {strides = array<i32>} : memref<144x256xbf16, #tpu.memory_space<vmem>>, vector<16x256xbf16>,
    %c241_i32 = arith.constant 241 : i32
    %47 = tpu.dynamic_rotate %14 by %c241_i32 dim 1 : vector<16x256xf32>, i32 -> vector<16x256xf32>
    %48 = vector.extract_strided_slice %0 {offsets = [6, 0], sizes = [1, 256], strides = [1, 1]} : vector<9x256xf32> to vector<1x256xf32>
    %49 = vector.broadcast %48 : vector<1x256xf32> to vector<16x256xf32>
    %50 = arith.mulf %47, %49 : vector<16x256xf32>
    %51 = arith.truncf %50 : vector<16x256xf32> to vector<16x256xbf16>
    %c96 = arith.constant 96 : index
    %c0_17 = arith.constant 0 : index
    %52 = vector.load %arg8[%c96, %c0_17] : memref<144x256xbf16, #tpu.memory_space<vmem>>, vector<16x256xbf16>
    tpu.vector_store %arg8[%c96, %c0_17], %51 {strides = array<i32>} : memref<144x256xbf16, #tpu.memory_space<vmem>>, vector<16x256xbf16>,
    %c240_i32 = arith.constant 240 : i32
    %53 = tpu.dynamic_rotate %14 by %c240_i32 dim 1 : vector<16x256xf32>, i32 -> vector<16x256xf32>
    %54 = vector.extract_strided_slice %0 {offsets = [7, 0], sizes = [1, 256], strides = [1, 1]} : vector<9x256xf32> to vector<1x256xf32>
    %55 = vector.broadcast %54 : vector<1x256xf32> to vector<16x256xf32>
    %56 = arith.mulf %53, %55 : vector<16x256xf32>
    %57 = arith.truncf %56 : vector<16x256xf32> to vector<16x256xbf16>
    %c112 = arith.constant 112 : index
    %c0_18 = arith.constant 0 : index
    %58 = vector.load %arg8[%c112, %c0_18] : memref<144x256xbf16, #tpu.memory_space<vmem>>, vector<16x256xbf16>
    tpu.vector_store %arg8[%c112, %c0_18], %57 {strides = array<i32>} : memref<144x256xbf16, #tpu.memory_space<vmem>>, vector<16x256xbf16>,
    %c239_i32 = arith.constant 239 : i32
    %59 = tpu.dynamic_rotate %14 by %c239_i32 dim 1 : vector<16x256xf32>, i32 -> vector<16x256xf32>
    %60 = vector.extract_strided_slice %0 {offsets = [8, 0], sizes = [1, 256], strides = [1, 1]} : vector<9x256xf32> to vector<1x256xf32>
    %61 = vector.broadcast %60 : vector<1x256xf32> to vector<16x256xf32>
    %62 = arith.mulf %59, %61 : vector<16x256xf32>
    %63 = arith.truncf %62 : vector<16x256xf32> to vector<16x256xbf16>
    %c128 = arith.constant 128 : index
    %c0_19 = arith.constant 0 : index
    %64 = vector.load %arg8[%c128, %c0_19] : memref<144x256xbf16, #tpu.memory_space<vmem>>, vector<16x256xbf16>
    tpu.vector_store %arg8[%c128, %c0_19], %63 {strides = array<i32>} : memref<144x256xbf16, #tpu.memory_space<vmem>>, vector<16x256xbf16>,
    %c0_20 = arith.constant 0 : index
    %c0_21 = arith.constant 0 : index
    %65 = vector.load %arg5[%c0_20, %c0_21] : memref<8x144xbf16, #tpu.memory_space<vmem>>, vector<8x144xbf16>
    %c0_22 = arith.constant 0 : index
    %c0_23 = arith.constant 0 : index
    %66 = vector.load %arg8[%c0_22, %c0_23] : memref<144x256xbf16, #tpu.memory_space<vmem>>, vector<144x256xbf16>
    %cst_24 = arith.constant dense<0.000000e+00> : vector<8x256xf32>
    %67 = tpu.matmul %65, %66, %cst_24 {dimension_numbers = #tpu.dot_dimension_numbers<[1], [0], [0], [1], [0, 0, 1, 1], [], []>} : vector<8x144xbf16>, vector<144x256xbf16>, vector<8x256xf32> -> vector<8x256xf32>
    %c0_25 = arith.constant 0 : index
    %c0_26 = arith.constant 0 : index
    %c0_27 = arith.constant 0 : index
    %68 = vector.load %arg6[%c0_25, %c0_26, %c0_27] : memref<1x8x256xf32, #tpu.memory_space<vmem>>, vector<1x8x256xf32>
    %69 = vector.shape_cast %68 : vector<1x8x256xf32> to vector<8x256xf32>
    %70 = vector.shape_cast %67 : vector<8x256xf32> to vector<1x8x256xf32>
    tpu.vector_store %arg6[%c0_25, %c0_26, %c0_27], %70 {strides = array<i32>} : memref<1x8x256xf32, #tpu.memory_space<vmem>>, vector<1x8x256xf32>,
    %cst_28 = arith.constant dense<0.000000e+00> : vector<8xf32>
    %71 = vector.multi_reduction <add>, %67, %cst_28 [1] : vector<8x256xf32> to vector<8xf32>
    %72 = vector.shape_cast %71 : vector<8xf32> to vector<8x1xf32>
    %73 = arith.mulf %67, %67 : vector<8x256xf32>
    %cst_29 = arith.constant dense<0.000000e+00> : vector<8xf32>
    %74 = vector.multi_reduction <add>, %73, %cst_29 [1] : vector<8x256xf32> to vector<8xf32>
    %75 = vector.shape_cast %74 : vector<8xf32> to vector<8x1xf32>
    %76 = tpu.concatenate %72, %75 in 1 : vector<8x1xf32>, vector<8x1xf32> -> vector<8x2xf32>
    %77 = arith.addf %1, %76 : vector<8x2xf32>
    %c0_30 = arith.constant 0 : index
    %c0_31 = arith.constant 0 : index
    %c0_32 = arith.constant 0 : index
    %78 = vector.load %arg7[%c0_30, %c0_31, %c0_32] : memref<1x8x2xf32, #tpu.memory_space<vmem>>, vector<1x8x2xf32>
    %79 = vector.shape_cast %78 : vector<1x8x2xf32> to vector<8x2xf32>
    %80 = vector.shape_cast %77 : vector<8x2xf32> to vector<1x8x2xf32>
    tpu.vector_store %arg7[%c0_30, %c0_31, %c0_32], %80 {strides = array<i32>} : memref<1x8x2xf32, #tpu.memory_space<vmem>>, vector<1x8x2xf32>,
    return
  }
  func.func @transform_0(%arg0: i32) -> (i32, i32) {
    %c0_i32 = arith.constant 0 : i32
    %c0_i32_0 = arith.constant 0 : i32
    %c0_i32_1 = arith.constant 0 : i32
    return %c0_i32, %c0_i32_0 : i32, i32
  }
  func.func @transform_1(%arg0: i32) -> (i32, i32) {
    %c0_i32 = arith.constant 0 : i32
    %c0_i32_0 = arith.constant 0 : i32
    %c0_i32_1 = arith.constant 0 : i32
    return %c0_i32, %c0_i32_0 : i32, i32
  }
  func.func @transform_2(%arg0: i32) -> (i32, i32) {
    %c0_i32 = arith.constant 0 : i32
    %c0_i32_0 = arith.constant 0 : i32
    %c0_i32_1 = arith.constant 0 : i32
    return %c0_i32, %c0_i32_0 : i32, i32
  }
  func.func @transform_3(%arg0: i32) -> (i32, i32, i32) {
    %c0_i32 = arith.constant 0 : i32
    %c0_i32_0 = arith.constant 0 : i32
    %c0_i32_1 = arith.constant 0 : i32
    return %arg0, %c0_i32, %c0_i32_0 : i32, i32, i32
  }
  func.func @transform_4(%arg0: i32) -> (i32, i32) {
    %c0_i32 = arith.constant 0 : i32
    %c0_i32_0 = arith.constant 0 : i32
    %c0_i32_1 = arith.constant 0 : i32
    return %c0_i32, %c0_i32_0 : i32, i32
  }
  func.func @transform_5(%arg0: i32) -> (i32, i32, i32) {
    %c0_i32 = arith.constant 0 : i32
    %c0_i32_0 = arith.constant 0 : i32
    %c0_i32_1 = arith.constant 0 : i32
    return %arg0, %c0_i32, %c0_i32_0 : i32, i32, i32
  }
  func.func @transform_6(%arg0: i32) -> (i32, i32, i32) {
    %c0_i32 = arith.constant 0 : i32
    %c0_i32_0 = arith.constant 0 : i32
    %c0_i32_1 = arith.constant 0 : i32
    return %arg0, %c0_i32, %c0_i32_0 : i32, i32, i32
  }
}

module attributes {stable_mosaic.version = 11 : i64} {
  func.func @_affine_kernel(%arg0: i32, %arg1: memref<4x1xf32, #tpu.memory_space<vmem>>, %arg2: memref<4x1xf32, #tpu.memory_space<vmem>>, %arg3: memref<1x8x256xf32, #tpu.memory_space<vmem>>, %arg4: memref<1x4x256xf32, #tpu.memory_space<vmem>>) attributes {dimension_semantics = [#tpu.dimension_semantics<parallel>], iteration_bounds = array<i64: 2>, scalar_prefetch = 0 : i64, scratch_operands = 0 : i64, tpu.core_type = #tpu.core_type<tc>, window_params = [{pipeline_mode = #tpu.pipeline_mode<synchronous>, transform_indices = @transform_0, window_bounds = array<i64: 4, 1>}, {pipeline_mode = #tpu.pipeline_mode<synchronous>, transform_indices = @transform_1, window_bounds = array<i64: 4, 1>}, {transform_indices = @transform_2, window_bounds = array<i64: 1, 8, 256>}, {transform_indices = @transform_3, window_bounds = array<i64: 1, 4, 256>}]} {
    %c0 = arith.constant 0 : index
    %c0_0 = arith.constant 0 : index
    %c0_1 = arith.constant 0 : index
    %0 = vector.load %arg3[%c0, %c0_0, %c0_1] : memref<1x8x256xf32, #tpu.memory_space<vmem>>, vector<1x4x256xf32>
    %c0_2 = arith.constant 0 : index
    %c0_3 = arith.constant 0 : index
    %1 = vector.load %arg1[%c0_2, %c0_3] : memref<4x1xf32, #tpu.memory_space<vmem>>, vector<4x1xf32>
    %2 = vector.shape_cast %1 : vector<4x1xf32> to vector<1x4x1xf32>
    %3 = vector.broadcast %2 : vector<1x4x1xf32> to vector<1x4x256xf32>
    %4 = arith.mulf %0, %3 : vector<1x4x256xf32>
    %c0_4 = arith.constant 0 : index
    %c0_5 = arith.constant 0 : index
    %5 = vector.load %arg2[%c0_4, %c0_5] : memref<4x1xf32, #tpu.memory_space<vmem>>, vector<4x1xf32>
    %6 = vector.shape_cast %5 : vector<4x1xf32> to vector<1x4x1xf32>
    %7 = vector.broadcast %6 : vector<1x4x1xf32> to vector<1x4x256xf32>
    %8 = arith.addf %4, %7 : vector<1x4x256xf32>
    %c0_6 = arith.constant 0 : index
    %c0_7 = arith.constant 0 : index
    %c0_8 = arith.constant 0 : index
    %9 = vector.load %arg4[%c0_6, %c0_7, %c0_8] : memref<1x4x256xf32, #tpu.memory_space<vmem>>, vector<1x4x256xf32>
    tpu.vector_store %arg4[%c0_6, %c0_7, %c0_8], %8 {strides = array<i32>} : memref<1x4x256xf32, #tpu.memory_space<vmem>>, vector<1x4x256xf32>,
    return
  }
  func.func @transform_0(%arg0: i32) -> (i32, i32) {
    %c0_i32 = arith.constant 0 : i32
    %c0_i32_0 = arith.constant 0 : i32
    %c0_i32_1 = arith.constant 0 : i32
    return %c0_i32, %c0_i32_0 : i32, i32
  }
  func.func @transform_1(%arg0: i32) -> (i32, i32) {
    %c0_i32 = arith.constant 0 : i32
    %c0_i32_0 = arith.constant 0 : i32
    %c0_i32_1 = arith.constant 0 : i32
    return %c0_i32, %c0_i32_0 : i32, i32
  }
  func.func @transform_2(%arg0: i32) -> (i32, i32, i32) {
    %c0_i32 = arith.constant 0 : i32
    %c0_i32_0 = arith.constant 0 : i32
    %c0_i32_1 = arith.constant 0 : i32
    return %arg0, %c0_i32, %c0_i32_0 : i32, i32, i32
  }
  func.func @transform_3(%arg0: i32) -> (i32, i32, i32) {
    %c0_i32 = arith.constant 0 : i32
    %c0_i32_0 = arith.constant 0 : i32
    %c0_i32_1 = arith.constant 0 : i32
    return %arg0, %c0_i32, %c0_i32_0 : i32, i32, i32
  }
}

</mosaic_0001>

<llo_original>
// kernel: resblock_forward.5
$region0: #{resblock_forward.5}
  #allocation0 [shape = 'u32[]', space=smem, size = 0x4, offset = 0x4, fixed_abs, tag = 'smem constant byte address 0x4 - core index']
  #allocation1 [shape = 'u32[144,128]{1,0:T(1,128)}', space=vmem, size = 0x12000, scoped, tag = 'internal scratch']
  %s0 = inlined_call_operand.vmem [shape: f32[4,1], index: 0, kind: input, shape index: {}]
  %s1 = inlined_call_operand.vmem [shape: f32[4,1], index: 1, kind: input, shape index: {}]
  %s2 = inlined_call_operand.vmem [shape: f32[2,8,256], index: 2, kind: input, shape index: {}]
  %s3 = inlined_call_operand.vmem [shape: f32[2,4,256], index: 3, kind: output, shape index: {}]
  %s4 = sld [smem:[#allocation0]]
  $region45: #{resblock_forward.5} parent=0
    _
  %s6 = ssub.s32 1, %s4
  %s7 = scalar_select 0, %s6, %s4
  loop: start=0, step=1, limit=4
  $region2: #{resblock_forward.5} parent=0 // loop_pre_header
    _
  $region3: #{resblock_forward.5} parent=0 // loop_header
    %s9 = sphi 0, %s13
    %p10 = scmp.ge.s32.totalorder %s9, 4
    %s17 = sphi 0, %s17
    %s19 = sphi 0, %s17
    %s20 = sphi 0, %s19
    %s34 = sphi 0, %s20
    %s38 = sphi 0, %s38
    %s40 = sphi 0, %s38
    %s41 = sphi 0, %s40
    %s55 = sphi 0, %s41
    %s61 = sphi 0, %s63
    %s64 = sphi 0, %s61
    %s65 = sphi 0, %s64
    %s81 = sphi 0, %s65
    %s87 = sphi 0, %s89
    %s90 = sphi 0, %s87
    %s91 = sphi 0, %s90
    %s107 = sphi 0, %s91
  $region4: #{resblock_forward.5} parent=0 // loop_header_branch
    %12 = sbr.rel (%p10) target = $region8
  $region5: #{resblock_forward.5} parent=0 // loop_body
    %s14 = ssub.s32 %s9, 1
    %s15 = ssub.s32 %s9, 2
    %s16 = sadd.s32 %s9, 1
    %s18 = sadd.s32 %s17, 1
    %p21 = scmp.eq.s32.totalorder %s9, 1
    %p22 = scmp.ne.s32.totalorder %s17, %s19
    %p23 = scmp.eq.s32.totalorder %s9, 0
    %p24 = por %p22, %p23
    %p25 = scmp.ne.s32.totalorder %s17, %s19
    %p26 = scmp.eq.s32.totalorder %s14, 1
    %p27 = por %p25, %p26
    %p28 = scmp.ne.s32.totalorder %s19, %s20
    %p29 = scmp.eq.s32.totalorder %s14, 0
    %p30 = por %p28, %p29
    %p31 = scmp.ne.s32.totalorder %s19, %s20
    %p32 = scmp.eq.s32.totalorder %s15, 1
    %p33 = por %p31, %p32
    %p35 = scmp.ne.s32.totalorder %s20, %s34
    %p36 = scmp.eq.s32.totalorder %s15, 0
    %p37 = por %p35, %p36
    %s39 = sadd.s32 %s38, 1
    %p42 = scmp.eq.s32.totalorder %s9, 1
    %p43 = scmp.ne.s32.totalorder %s38, %s40
    %p44 = scmp.eq.s32.totalorder %s9, 0
    %p45 = por %p43, %p44
    %p46 = scmp.ne.s32.totalorder %s38, %s40
    %p47 = scmp.eq.s32.totalorder %s14, 1
    %p48 = por %p46, %p47
    %p49 = scmp.ne.s32.totalorder %s40, %s41
    %p50 = scmp.eq.s32.totalorder %s14, 0
    %p51 = por %p49, %p50
    %p52 = scmp.ne.s32.totalorder %s40, %s41
    %p53 = scmp.eq.s32.totalorder %s15, 1
    %p54 = por %p52, %p53
    %p56 = scmp.ne.s32.totalorder %s41, %s55
    %p57 = scmp.eq.s32.totalorder %s15, 0
    %p58 = por %p56, %p57
    %s59 = ssub.s32 %s9, %s16
    %p60 = scmp.eq.s32.totalorder %s59, 0
    %s62 = sadd.s32 %s61, 1
    %s63 = scalar_select %p60, %s61, %s62
    %p66 = pneg %p60
    %p67 = scmp.eq.s32.totalorder %s9, 1
    %p68 = por %p66, %p67
    %p69 = scmp.ne.s32.totalorder %s61, %s64
    %p70 = scmp.eq.s32.totalorder %s9, 0
    %p71 = por %p69, %p70
    %p72 = scmp.ne.s32.totalorder %s61, %s64
    %p73 = scmp.eq.s32.totalorder %s14, 1
    %p74 = por %p72, %p73
    %p75 = scmp.ne.s32.totalorder %s64, %s65
    %p76 = scmp.eq.s32.totalorder %s14, 0
    %p77 = por %p75, %p76
    %p78 = scmp.ne.s32.totalorder %s64, %s65
    %p79 = scmp.eq.s32.totalorder %s15, 1
    %p80 = por %p78, %p79
    %p82 = scmp.ne.s32.totalorder %s65, %s81
    %p83 = scmp.eq.s32.totalorder %s15, 0
    %p84 = por %p82, %p83
    %s85 = ssub.s32 %s9, %s16
    %p86 = scmp.eq.s32.totalorder %s85, 0
    %s88 = sadd.s32 %s87, 1
    %s89 = scalar_select %p86, %s87, %s88
    %p92 = pneg %p86
    %p93 = scmp.eq.s32.totalorder %s9, 1
    %p94 = por %p92, %p93
    %p95 = scmp.ne.s32.totalorder %s87, %s90
    %p96 = scmp.eq.s32.totalorder %s9, 0
    %p97 = por %p95, %p96
    %p98 = scmp.ne.s32.totalorder %s87, %s90
    %p99 = scmp.eq.s32.totalorder %s14, 1
    %p100 = por %p98, %p99
    %p101 = scmp.ne.s32.totalorder %s90, %s91
    %p102 = scmp.eq.s32.totalorder %s14, 0
    %p103 = por %p101, %p102
    %p104 = scmp.ne.s32.totalorder %s90, %s91
    %p105 = scmp.eq.s32.totalorder %s15, 1
    %p106 = por %p104, %p105
    %p108 = scmp.ne.s32.totalorder %s91, %s107
    %p109 = scmp.eq.s32.totalorder %s15, 0
    %p110 = por %p108, %p109
    %p111 = scmp.le.s32.totalorder 1, %s9
    %p112 = scmp.lt.s32.totalorder %s9, 3
    %p113 = pnand %p111, %p112
    %p114 = pneg %p113
    // Predicated region
    $region9: #{resblock_forward.5} parent=5 // pred_check
      _
    $region10: #{resblock_forward.5} parent=5 // pred_check_branch
      %116 = sbr.rel (%p113) target = $region12
    $region11: #{resblock_forward.5} parent=5 // pred_region
      %s117 = ssub.s32 %s9, 1
      // Predicated region
      $region13: #{resblock_forward.5} parent=11 // pred_check
        %p118 = pneg %p30
      $region14: #{resblock_forward.5} parent=11 // pred_check_branch
        %120 = sbr.rel (%p118) target = $region16
      $region15: #{resblock_forward.5} parent=11 // pred_region
        _
      $region16: #{resblock_forward.5} parent=11 // pred_fallthru
        _
      // Predicated region
      $region17: #{resblock_forward.5} parent=11 // pred_check
        %p121 = pneg %p51
      $region18: #{resblock_forward.5} parent=11 // pred_check_branch
        %123 = sbr.rel (%p121) target = $region20
      $region19: #{resblock_forward.5} parent=11 // pred_region
        _
      $region20: #{resblock_forward.5} parent=11 // pred_fallthru
        _
    $region12: #{resblock_forward.5} parent=5 // pred_fallthru
      _
    %p124 = scmp.lt.s32.totalorder %s9, 2
    // Predicated region
    $region21: #{resblock_forward.5} parent=5 // pred_check
      %p125 = pneg %p124
    $region22: #{resblock_forward.5} parent=5 // pred_check_branch
      %127 = sbr.rel (%p125) target = $region24
    $region23: #{resblock_forward.5} parent=5 // pred_region
      // Predicated region
      $region25: #{resblock_forward.5} parent=23 // pred_check
        %p128 = pneg %p71
      $region26: #{resblock_forward.5} parent=23 // pred_check_branch
        %130 = sbr.rel (%p128) target = $region28
      $region27: #{resblock_forward.5} parent=23 // pred_region
        %p131 = scmp.lt.s32.totalorder %s9, 1
        %s132 = scalar_select %p131, %s9, 1
        %s133 = smul.addr %s132, 2
        %s134 = smul.addr %s133, 8
        %s135 = scalar_lea.vmem %s2, %s134
      $region28: #{resblock_forward.5} parent=23 // pred_fallthru
        _
    $region24: #{resblock_forward.5} parent=5 // pred_fallthru
      _
    %p136 = scmp.le.s32.totalorder 1, %s9
    %p137 = scmp.lt.s32.totalorder %s9, 3
    %p138 = pnand %p136, %p137
    %p139 = pneg %p138
    // Predicated region
    $region29: #{resblock_forward.5} parent=5 // pred_check
      _
    $region30: #{resblock_forward.5} parent=5 // pred_check_branch
      %141 = sbr.rel (%p138) target = $region32
    $region31: #{resblock_forward.5} parent=5 // pred_region
      %s142 = ssub.s32 %s9, 1
      %p143 = pneg %p30
      %p144 = pneg %p27
      %p145 = pneg %p51
      %p146 = pneg %p48
      %p147 = scmp.lt.s32.totalorder %s14, 1
      %s148 = scalar_select %p147, %s14, 1
      %s149 = smul.addr %s148, 2
      %s150 = smul.addr %s149, 8
      %s151 = scalar_lea.vmem %s2, %s150
      %p152 = pneg %p77
      %p153 = pneg %p74
      %p154 = pneg %p103
      %p155 = pneg %p100
      %p156 = scmp.lt.s32.totalorder %s14, 1
      %s157 = scalar_select %p156, %s14, 1
      %s158 = smul.addr %s157, 2
      %s159 = smul.addr %s158, 4
      %s160 = scalar_lea.vmem %s3, %s159
      %p161 = scmp.lt.s32.totalorder %s14, 1
      %s162 = scalar_select %p161, %s14, 1
      %s163 = smul.addr %s162, 2
      %s164 = smul.addr %s163, 8
      %s165 = scalar_lea.vmem %s2, %s164
      %p166 = scmp.lt.s32.totalorder %s14, 1
      %s167 = scalar_select %p166, %s14, 1
      %s168 = smul.addr %s167, 2
      %s169 = smul.addr %s168, 4
      %s170 = scalar_lea.vmem %s3, %s169
      %v171 = vld [vmem:[%s165] sm:$0xf]
      %v172 = vld [vmem:[%s165 + $0x8] sm:$0xf]
      %v173 = vld [vmem:[%s0] sm:$0xf]
      %175 = vset.pattern.permute.xlu0 0
      %176 = vperm.xlu0 %175, %v173
      %v177 = vpop.permute.xlu0 %176
      %v179 = vmul.f32 %v171, %v177
      %v180 = vmul.f32 %v172, %v177
      %v181 = vld [vmem:[%s1] sm:$0xf]
      %183 = vset.pattern.permute.xlu0 0
      %184 = vperm.xlu0 %183, %v181
      %v185 = vpop.permute.xlu0 %184
      %v187 = vadd.f32 %v179, %v185
      %v188 = vadd.f32 %v180, %v185
      %v191 = vcombine.low %v187, %v188
      %193 = vst [vmem:[%s170] sm:$0xff] %v191
      %p194 = scmp.lt.s32.totalorder %s14, 1
      %s195 = scalar_select %p194, %s14, 1
      %s196 = smul.addr %s195, 2
      %s197 = smul.addr %s196, 4
      %s198 = scalar_lea.vmem %s3, %s197
      // Predicated region
      $region33: #{resblock_forward.5} parent=31 // pred_check
        %p199 = pneg %p100
      $region34: #{resblock_forward.5} parent=31 // pred_check_branch
        %201 = sbr.rel (%p199) target = $region36
      $region35: #{resblock_forward.5} parent=31 // pred_region
        _
      $region36: #{resblock_forward.5} parent=31 // pred_fallthru
        _
    $region32: #{resblock_forward.5} parent=5 // pred_fallthru
      _
    %p202 = scmp.le.s32.totalorder 2, %s9
    // Predicated region
    $region37: #{resblock_forward.5} parent=5 // pred_check
      %p203 = pneg %p202
    $region38: #{resblock_forward.5} parent=5 // pred_check_branch
      %205 = sbr.rel (%p203) target = $region40
    $region39: #{resblock_forward.5} parent=5 // pred_region
      %s206 = ssub.s32 %s9, 2
      // Predicated region
      $region41: #{resblock_forward.5} parent=39 // pred_check
        %p207 = pneg %p106
      $region42: #{resblock_forward.5} parent=39 // pred_check_branch
        %209 = sbr.rel (%p207) target = $region44
      $region43: #{resblock_forward.5} parent=39 // pred_region
        %p210 = scmp.lt.s32.totalorder %s15, 1
        %s211 = scalar_select %p210, %s15, 1
        %s212 = smul.addr %s211, 2
        %s213 = smul.addr %s212, 4
        %s214 = scalar_lea.vmem %s3, %s213
      $region44: #{resblock_forward.5} parent=39 // pred_fallthru
        _
    $region40: #{resblock_forward.5} parent=5 // pred_fallthru
      _
  $region6: #{resblock_forward.5} parent=0 // loop_footer
    %s13 = sadd.s32 1, %s9
  $region7: #{resblock_forward.5} parent=0 // loop_footer_branch
    %8 = sbr.rel target = $region3
  $region8: #{resblock_forward.5} parent=0 // loop_exit
    _

// kernel: resblock_forward.3
$region0: #{resblock_forward.3}
  #allocation0 [shape = 'u32[]', space=smem, size = 0x4, offset = 0x4, fixed_abs, tag = 'smem constant byte address 0x4 - core index']
  #allocation1 [shape = 'u32[144,128]{1,0:T(1,128)}', space=vmem, size = 0x12000, scoped, tag = 'internal scratch']
  #allocation2 [shape = 'bf16[144,256]{1,0:T(8,128)(2,1)}', space=vmem, size = 0x12000, scoped, tag = 'scratch operand']
  %s0 = inlined_call_operand.vmem [shape: f32[16,1], index: 0, kind: input, shape index: {}]
  %s1 = inlined_call_operand.vmem [shape: f32[16,1], index: 1, kind: input, shape index: {}]
  %s2 = inlined_call_operand.vmem [shape: f32[9,256], index: 2, kind: input, shape index: {}]
  %s3 = inlined_call_operand.vmem [shape: f32[2,16,256], index: 3, kind: input, shape index: {}]
  %s4 = inlined_call_operand.vmem [shape: bf16[16,144], index: 4, kind: input, shape index: {}]
  %s5 = inlined_call_operand.vmem [shape: bf16[2,16,256], index: 5, kind: output, shape index: {0}]
  %s6 = inlined_call_operand.vmem [shape: f32[2,16,2], index: 6, kind: output, shape index: {1}]
  %7 = xla_tuple %s5, %s6
  %s8 = sld [smem:[#allocation0]]
  $region61: #{resblock_forward.3} parent=0
    _
  %s10 = ssub.s32 1, %s8
  %s11 = scalar_select 0, %s10, %s8
  loop: start=0, step=1, limit=4
  $region2: #{resblock_forward.3} parent=0 // loop_pre_header
    _
  $region3: #{resblock_forward.3} parent=0 // loop_header
    %s13 = sphi 0, %s17
    %p14 = scmp.ge.s32.totalorder %s13, 4
    %s21 = sphi 0, %s21
    %s23 = sphi 0, %s21
    %s24 = sphi 0, %s23
    %s38 = sphi 0, %s24
    %s42 = sphi 0, %s42
    %s44 = sphi 0, %s42
    %s45 = sphi 0, %s44
    %s59 = sphi 0, %s45
    %s63 = sphi 0, %s63
    %s65 = sphi 0, %s63
    %s66 = sphi 0, %s65
    %s80 = sphi 0, %s66
    %s86 = sphi 0, %s88
    %s89 = sphi 0, %s86
    %s90 = sphi 0, %s89
    %s106 = sphi 0, %s90
    %s110 = sphi 0, %s110
    %s112 = sphi 0, %s110
    %s113 = sphi 0, %s112
    %s127 = sphi 0, %s113
    %s133 = sphi 0, %s135
    %s136 = sphi 0, %s133
    %s137 = sphi 0, %s136
    %s153 = sphi 0, %s137
    %s159 = sphi 0, %s161
    %s162 = sphi 0, %s159
    %s163 = sphi 0, %s162
    %s179 = sphi 0, %s163
  $region4: #{resblock_forward.3} parent=0 // loop_header_branch
    %16 = sbr.rel (%p14) target = $region8
  $region5: #{resblock_forward.3} parent=0 // loop_body
    %s18 = ssub.s32 %s13, 1
    %s19 = ssub.s32 %s13, 2
    %s20 = sadd.s32 %s13, 1
    %s22 = sadd.s32 %s21, 1
    %p25 = scmp.eq.s32.totalorder %s13, 1
    %p26 = scmp.ne.s32.totalorder %s21, %s23
    %p27 = scmp.eq.s32.totalorder %s13, 0
    %p28 = por %p26, %p27
    %p29 = scmp.ne.s32.totalorder %s21, %s23
    %p30 = scmp.eq.s32.totalorder %s18, 1
    %p31 = por %p29, %p30
    %p32 = scmp.ne.s32.totalorder %s23, %s24
    %p33 = scmp.eq.s32.totalorder %s18, 0
    %p34 = por %p32, %p33
    %p35 = scmp.ne.s32.totalorder %s23, %s24
    %p36 = scmp.eq.s32.totalorder %s19, 1
    %p37 = por %p35, %p36
    %p39 = scmp.ne.s32.totalorder %s24, %s38
    %p40 = scmp.eq.s32.totalorder %s19, 0
    %p41 = por %p39, %p40
    %s43 = sadd.s32 %s42, 1
    %p46 = scmp.eq.s32.totalorder %s13, 1
    %p47 = scmp.ne.s32.totalorder %s42, %s44
    %p48 = scmp.eq.s32.totalorder %s13, 0
    %p49 = por %p47, %p48
    %p50 = scmp.ne.s32.totalorder %s42, %s44
    %p51 = scmp.eq.s32.totalorder %s18, 1
    %p52 = por %p50, %p51
    %p53 = scmp.ne.s32.totalorder %s44, %s45
    %p54 = scmp.eq.s32.totalorder %s18, 0
    %p55 = por %p53, %p54
    %p56 = scmp.ne.s32.totalorder %s44, %s45
    %p57 = scmp.eq.s32.totalorder %s19, 1
    %p58 = por %p56, %p57
    %p60 = scmp.ne.s32.totalorder %s45, %s59
    %p61 = scmp.eq.s32.totalorder %s19, 0
    %p62 = por %p60, %p61
    %s64 = sadd.s32 %s63, 1
    %p67 = scmp.eq.s32.totalorder %s13, 1
    %p68 = scmp.ne.s32.totalorder %s63, %s65
    %p69 = scmp.eq.s32.totalorder %s13, 0
    %p70 = por %p68, %p69
    %p71 = scmp.ne.s32.totalorder %s63, %s65
    %p72 = scmp.eq.s32.totalorder %s18, 1
    %p73 = por %p71, %p72
    %p74 = scmp.ne.s32.totalorder %s65, %s66
    %p75 = scmp.eq.s32.totalorder %s18, 0
    %p76 = por %p74, %p75
    %p77 = scmp.ne.s32.totalorder %s65, %s66
    %p78 = scmp.eq.s32.totalorder %s19, 1
    %p79 = por %p77, %p78
    %p81 = scmp.ne.s32.totalorder %s66, %s80
    %p82 = scmp.eq.s32.totalorder %s19, 0
    %p83 = por %p81, %p82
    %s84 = ssub.s32 %s13, %s20
    %p85 = scmp.eq.s32.totalorder %s84, 0
    %s87 = sadd.s32 %s86, 1
    %s88 = scalar_select %p85, %s86, %s87
    %p91 = pneg %p85
    %p92 = scmp.eq.s32.totalorder %s13, 1
    %p93 = por %p91, %p92
    %p94 = scmp.ne.s32.totalorder %s86, %s89
    %p95 = scmp.eq.s32.totalorder %s13, 0
    %p96 = por %p94, %p95
    %p97 = scmp.ne.s32.totalorder %s86, %s89
    %p98 = scmp.eq.s32.totalorder %s18, 1
    %p99 = por %p97, %p98
    %p100 = scmp.ne.s32.totalorder %s89, %s90
    %p101 = scmp.eq.s32.totalorder %s18, 0
    %p102 = por %p100, %p101
    %p103 = scmp.ne.s32.totalorder %s89, %s90
    %p104 = scmp.eq.s32.totalorder %s19, 1
    %p105 = por %p103, %p104
    %p107 = scmp.ne.s32.totalorder %s90, %s106
    %p108 = scmp.eq.s32.totalorder %s19, 0
    %p109 = por %p107, %p108
    %s111 = sadd.s32 %s110, 1
    %p114 = scmp.eq.s32.totalorder %s13, 1
    %p115 = scmp.ne.s32.totalorder %s110, %s112
    %p116 = scmp.eq.s32.totalorder %s13, 0
    %p117 = por %p115, %p116
    %p118 = scmp.ne.s32.totalorder %s110, %s112
    %p119 = scmp.eq.s32.totalorder %s18, 1
    %p120 = por %p118, %p119
    %p121 = scmp.ne.s32.totalorder %s112, %s113
    %p122 = scmp.eq.s32.totalorder %s18, 0
    %p123 = por %p121, %p122
    %p124 = scmp.ne.s32.totalorder %s112, %s113
    %p125 = scmp.eq.s32.totalorder %s19, 1
    %p126 = por %p124, %p125
    %p128 = scmp.ne.s32.totalorder %s113, %s127
    %p129 = scmp.eq.s32.totalorder %s19, 0
    %p130 = por %p128, %p129
    %s131 = ssub.s32 %s13, %s20
    %p132 = scmp.eq.s32.totalorder %s131, 0
    %s134 = sadd.s32 %s133, 1
    %s135 = scalar_select %p132, %s133, %s134
    %p138 = pneg %p132
    %p139 = scmp.eq.s32.totalorder %s13, 1
    %p140 = por %p138, %p139
    %p141 = scmp.ne.s32.totalorder %s133, %s136
    %p142 = scmp.eq.s32.totalorder %s13, 0
    %p143 = por %p141, %p142
    %p144 = scmp.ne.s32.totalorder %s133, %s136
    %p145 = scmp.eq.s32.totalorder %s18, 1
    %p146 = por %p144, %p145
    %p147 = scmp.ne.s32.totalorder %s136, %s137
    %p148 = scmp.eq.s32.totalorder %s18, 0
    %p149 = por %p147, %p148
    %p150 = scmp.ne.s32.totalorder %s136, %s137
    %p151 = scmp.eq.s32.totalorder %s19, 1
    %p152 = por %p150, %p151
    %p154 = scmp.ne.s32.totalorder %s137, %s153
    %p155 = scmp.eq.s32.totalorder %s19, 0
    %p156 = por %p154, %p155
    %s157 = ssub.s32 %s13, %s20
    %p158 = scmp.eq.s32.totalorder %s157, 0
    %s160 = sadd.s32 %s159, 1
    %s161 = scalar_select %p158, %s159, %s160
    %p164 = pneg %p158
    %p165 = scmp.eq.s32.totalorder %s13, 1
    %p166 = por %p164, %p165
    %p167 = scmp.ne.s32.totalorder %s159, %s162
    %p168 = scmp.eq.s32.totalorder %s13, 0
    %p169 = por %p167, %p168
    %p170 = scmp.ne.s32.totalorder %s159, %s162
    %p171 = scmp.eq.s32.totalorder %s18, 1
    %p172 = por %p170, %p171
    %p173 = scmp.ne.s32.totalorder %s162, %s163
    %p174 = scmp.eq.s32.totalorder %s18, 0
    %p175 = por %p173, %p174
    %p176 = scmp.ne.s32.totalorder %s162, %s163
    %p177 = scmp.eq.s32.totalorder %s19, 1
    %p178 = por %p176, %p177
    %p180 = scmp.ne.s32.totalorder %s163, %s179
    %p181 = scmp.eq.s32.totalorder %s19, 0
    %p182 = por %p180, %p181
    %p183 = scmp.le.s32.totalorder 1, %s13
    %p184 = scmp.lt.s32.totalorder %s13, 3
    %p185 = pnand %p183, %p184
    %p186 = pneg %p185
    // Predicated region
    $region9: #{resblock_forward.3} parent=5 // pred_check
      _
    $region10: #{resblock_forward.3} parent=5 // pred_check_branch
      %188 = sbr.rel (%p185) target = $region12
    $region11: #{resblock_forward.3} parent=5 // pred_region
      %s189 = ssub.s32 %s13, 1
      // Predicated region
      $region13: #{resblock_forward.3} parent=11 // pred_check
        %p190 = pneg %p34
      $region14: #{resblock_forward.3} parent=11 // pred_check_branch
        %192 = sbr.rel (%p190) target = $region16
      $region15: #{resblock_forward.3} parent=11 // pred_region
        _
      $region16: #{resblock_forward.3} parent=11 // pred_fallthru
        _
      // Predicated region
      $region17: #{resblock_forward.3} parent=11 // pred_check
        %p193 = pneg %p55
      $region18: #{resblock_forward.3} parent=11 // pred_check_branch
        %195 = sbr.rel (%p193) target = $region20
      $region19: #{resblock_forward.3} parent=11 // pred_region
        _
      $region20: #{resblock_forward.3} parent=11 // pred_fallthru
        _
      // Predicated region
      $region21: #{resblock_forward.3} parent=11 // pred_check
        %p196 = pneg %p76
      $region22: #{resblock_forward.3} parent=11 // pred_check_branch
        %198 = sbr.rel (%p196) target = $region24
      $region23: #{resblock_forward.3} parent=11 // pred_region
        _
      $region24: #{resblock_forward.3} parent=11 // pred_fallthru
        _
      // Predicated region
      $region25: #{resblock_forward.3} parent=11 // pred_check
        %p199 = pneg %p123
      $region26: #{resblock_forward.3} parent=11 // pred_check_branch
        %201 = sbr.rel (%p199) target = $region28
      $region27: #{resblock_forward.3} parent=11 // pred_region
        _
      $region28: #{resblock_forward.3} parent=11 // pred_fallthru
        _
    $region12: #{resblock_forward.3} parent=5 // pred_fallthru
      _
    %p202 = scmp.lt.s32.totalorder %s13, 2
    // Predicated region
    $region29: #{resblock_forward.3} parent=5 // pred_check
      %p203 = pneg %p202
    $region30: #{resblock_forward.3} parent=5 // pred_check_branch
      %205 = sbr.rel (%p203) target = $region32
    $region31: #{resblock_forward.3} parent=5 // pred_region
      // Predicated region
      $region33: #{resblock_forward.3} parent=31 // pred_check
        %p206 = pneg %p96
      $region34: #{resblock_forward.3} parent=31 // pred_check_branch
        %208 = sbr.rel (%p206) target = $region36
      $region35: #{resblock_forward.3} parent=31 // pred_region
        %p209 = scmp.lt.s32.totalorder %s13, 1
        %s210 = scalar_select %p209, %s13, 1
        %s211 = smul.addr %s210, 4
        %s212 = smul.addr %s211, 8
        %s213 = scalar_lea.vmem %s3, %s212
      $region36: #{resblock_forward.3} parent=31 // pred_fallthru
        _
    $region32: #{resblock_forward.3} parent=5 // pred_fallthru
      _
    %p214 = scmp.le.s32.totalorder 1, %s13
    %p215 = scmp.lt.s32.totalorder %s13, 3
    %p216 = pnand %p214, %p215
    %p217 = pneg %p216
    // Predicated region
    $region37: #{resblock_forward.3} parent=5 // pred_check
      _
    $region38: #{resblock_forward.3} parent=5 // pred_check_branch
      %219 = sbr.rel (%p216) target = $region40
    $region39: #{resblock_forward.3} parent=5 // pred_region
      %s220 = ssub.s32 %s13, 1
      %p221 = pneg %p34
      %p222 = pneg %p31
      %p223 = pneg %p55
      %p224 = pneg %p52
      %p225 = pneg %p76
      %p226 = pneg %p73
      %p227 = scmp.lt.s32.totalorder %s18, 1
      %s228 = scalar_select %p227, %s18, 1
      %s229 = smul.addr %s228, 4
      %s230 = smul.addr %s229, 8
      %s231 = scalar_lea.vmem %s3, %s230
      %p232 = pneg %p102
      %p233 = pneg %p99
      %p234 = pneg %p123
      %p235 = pneg %p120
      %p236 = pneg %p149
      %p237 = pneg %p146
      %p238 = scmp.lt.s32.totalorder %s18, 1
      %s239 = scalar_select %p238, %s18, 1
      %s240 = smul.addr %s239, 4
      %s241 = smul.addr %s240, 4
      %s242 = scalar_lea.vmem %s5, %s241
      %p243 = pneg %p175
      %p244 = pneg %p172
      %p245 = scmp.lt.s32.totalorder %s18, 1
      %s246 = scalar_select %p245, %s18, 1
      %s247 = smul.addr %s246, 2
      %s248 = smul.addr %s247, 8
      %s249 = scalar_lea.vmem %s6, %s248
      %p250 = scmp.lt.s32.totalorder %s18, 1
      %s251 = scalar_select %p250, %s18, 1
      %s252 = smul.addr %s251, 4
      %s253 = smul.addr %s252, 8
      %s254 = scalar_lea.vmem %s3, %s253
      %p255 = scmp.lt.s32.totalorder %s18, 1
      %s256 = scalar_select %p255, %s18, 1
      %s257 = smul.addr %s256, 4
      %s258 = smul.addr %s257, 4
      %s259 = scalar_lea.vmem %s5, %s258
      %p260 = scmp.lt.s32.totalorder %s18, 1
      %s261 = scalar_select %p260, %s18, 1
      %s262 = smul.addr %s261, 2
      %s263 = smul.addr %s262, 8
      %s264 = scalar_lea.vmem %s6, %s263
      %v266 = vld [vmem:[%s2] sm:$0xff]
      %v267 = vld [vmem:[%s2 + $0x8] sm:$0xff]
      %v268 = vld [vmem:[%s2 + $0x10] sm:$0x1]
      %v269 = vld [vmem:[%s2 + $0x18] sm:$0x1]
      %v270 = vld [vmem:[%s254] sm:$0xff]
      %v271 = vld [vmem:[%s254 + $0x8] sm:$0xff]
      %v272 = vld [vmem:[%s254 + $0x10] sm:$0xff]
      %v273 = vld [vmem:[%s254 + $0x18] sm:$0xff]
      %274 = vrot.lane.b32.xlu0 %v270, 17
      %v275 = vpop.permute.xlu0 %274
      %276 = vrot.lane.b32.xlu0 %v272, 17
      %v277 = vpop.permute.xlu0 %276
      %278 = vrot.lane.b32.xlu0 %v271, 17
      %v279 = vpop.permute.xlu0 %278
      %280 = vrot.lane.b32.xlu0 %v273, 17
      %v281 = vpop.permute.xlu0 %280
      %v282 = vlaneseq
      %v283 = vand.u32 %v282, 127
      %vm284 = vcmp.lt.s32.totalorder %v283, 17
      %v285 = vsel %vm284, %v275, %v279
      %v286 = vsel %vm284, %v277, %v281
      %v287 = vsel %vm284, %v279, %v275
      %v288 = vsel %vm284, %v281, %v277
      %v289 = vlaneseq
      %v290 = vshrl.u32 %v289, 7
      %v291 = vsub.s32 0, %v290
      %v292 = vrot.slane %v266, %v291
      %v293 = vlaneseq
      %v294 = vshrl.u32 %v293, 7
      %v295 = vsub.s32 0, %v294
      %v296 = vrot.slane %v267, %v295
      %v297 = vmul.f32 %v287, %v292
      %v298 = vmul.f32 %v285, %v296
      %v299 = vmul.f32 %v288, %v292
      %v300 = vmul.f32 %v286, %v296
      %v301 = vpack.c.bf16 %v299, %v297
      %v302 = vpack.c.bf16 %v300, %v298
      %v305 = vunpack.c.l.b16 %v301
      %v306 = vunpack.c.l.b16 %v302
      %v307 = vunpack.c.h.b16 %v301
      %v308 = vunpack.c.h.b16 %v302
      %v309 = vpack.c.b16 %v306, %v305
      %v310 = vpack.c.b16 %v308, %v307
      %313 = vst [vmem:[#allocation2] sm:$0xff] %v309
      %314 = vst [vmem:[#allocation2 + $0x8] sm:$0xff] %v310
      %315 = vrot.lane.b32.xlu0 %v270, 16
      %v316 = vpop.permute.xlu0 %315
      %317 = vrot.lane.b32.xlu0 %v272, 16
      %v318 = vpop.permute.xlu0 %317
      %319 = vrot.lane.b32.xlu0 %v271, 16
      %v320 = vpop.permute.xlu0 %319
      %321 = vrot.lane.b32.xlu0 %v273, 16
      %v322 = vpop.permute.xlu0 %321
      %vm323 = vcmp.lt.s32.totalorder %v283, 16
      %v324 = vsel %vm323, %v316, %v320
      %v325 = vsel %vm323, %v318, %v322
      %v326 = vsel %vm323, %v320, %v316
      %v327 = vsel %vm323, %v322, %v318
      %v328 = vlaneseq
      %v329 = vshrl.u32 %v328, 7
      %v330 = vsub.s32 1, %v329
      %v331 = vrot.slane %v266, %v330
      %v332 = vlaneseq
      %v333 = vshrl.u32 %v332, 7
      %v334 = vsub.s32 1, %v333
      %v335 = vrot.slane %v267, %v334
      %v336 = vmul.f32 %v326, %v331
      %v337 = vmul.f32 %v324, %v335
      %v338 = vmul.f32 %v327, %v331
      %v339 = vmul.f32 %v325, %v335
      %v340 = vpack.c.bf16 %v338, %v336
      %v341 = vpack.c.bf16 %v339, %v337
      %v344 = vunpack.c.l.b16 %v340
      %v345 = vunpack.c.l.b16 %v341
      %v346 = vunpack.c.h.b16 %v340
      %v347 = vunpack.c.h.b16 %v341
      %v348 = vpack.c.b16 %v345, %v344
      %v349 = vpack.c.b16 %v347, %v346
      %352 = vst [vmem:[#allocation2 + $0x10] sm:$0xff] %v348
      %353 = vst [vmem:[#allocation2 + $0x18] sm:$0xff] %v349
      %354 = vrot.lane.b32.xlu0 %v270, 15
      %v355 = vpop.permute.xlu0 %354
      %356 = vrot.lane.b32.xlu0 %v272, 15
      %v357 = vpop.permute.xlu0 %356
      %358 = vrot.lane.b32.xlu0 %v271, 15
      %v359 = vpop.permute.xlu0 %358
      %360 = vrot.lane.b32.xlu0 %v273, 15
      %v361 = vpop.permute.xlu0 %360
      %vm362 = vcmp.lt.s32.totalorder %v283, 15
      %v363 = vsel %vm362, %v355, %v359
      %v364 = vsel %vm362, %v357, %v361
      %v365 = vsel %vm362, %v359, %v355
      %v366 = vsel %vm362, %v361, %v357
      %v367 = vlaneseq
      %v368 = vshrl.u32 %v367, 7
      %v369 = vsub.s32 2, %v368
      %v370 = vrot.slane %v266, %v369
      %v371 = vlaneseq
      %v372 = vshrl.u32 %v371, 7
      %v373 = vsub.s32 2, %v372
      %v374 = vrot.slane %v267, %v373
      %v375 = vmul.f32 %v365, %v370
      %v376 = vmul.f32 %v363, %v374
      %v377 = vmul.f32 %v366, %v370
      %v378 = vmul.f32 %v364, %v374
      %v379 = vpack.c.bf16 %v377, %v375
      %v380 = vpack.c.bf16 %v378, %v376
      %v383 = vunpack.c.l.b16 %v379
      %v384 = vunpack.c.l.b16 %v380
      %v385 = vunpack.c.h.b16 %v379
      %v386 = vunpack.c.h.b16 %v380
      %v387 = vpack.c.b16 %v384, %v383
      %v388 = vpack.c.b16 %v386, %v385
      %391 = vst [vmem:[#allocation2 + $0x20] sm:$0xff] %v387
      %392 = vst [vmem:[#allocation2 + $0x28] sm:$0xff] %v388
      %393 = vrot.lane.b32.xlu0 %v270, 1
      %v394 = vpop.permute.xlu0 %393
      %395 = vrot.lane.b32.xlu0 %v272, 1
      %v396 = vpop.permute.xlu0 %395
      %397 = vrot.lane.b32.xlu0 %v271, 1
      %v398 = vpop.permute.xlu0 %397
      %399 = vrot.lane.b32.xlu0 %v273, 1
      %v400 = vpop.permute.xlu0 %399
      %vm401 = vcmp.lt.s32.totalorder %v283, 1
      %v402 = vsel %vm401, %v394, %v398
      %v403 = vsel %vm401, %v396, %v400
      %v404 = vsel %vm401, %v398, %v394
      %v405 = vsel %vm401, %v400, %v396
      %v406 = vlaneseq
      %v407 = vshrl.u32 %v406, 7
      %v408 = vsub.s32 3, %v407
      %v409 = vrot.slane %v266, %v408
      %v410 = vlaneseq
      %v411 = vshrl.u32 %v410, 7
      %v412 = vsub.s32 3, %v411
      %v413 = vrot.slane %v267, %v412
      %v414 = vmul.f32 %v404, %v409
      %v415 = vmul.f32 %v402, %v413
      %v416 = vmul.f32 %v405, %v409
      %v417 = vmul.f32 %v403, %v413
      %v418 = vpack.c.bf16 %v416, %v414
      %v419 = vpack.c.bf16 %v417, %v415
      %v422 = vunpack.c.l.b16 %v418
      %v423 = vunpack.c.l.b16 %v419
      %v424 = vunpack.c.h.b16 %v418
      %v425 = vunpack.c.h.b16 %v419
      %v426 = vpack.c.b16 %v423, %v422
      %v427 = vpack.c.b16 %v425, %v424
      %430 = vst [vmem:[#allocation2 + $0x30] sm:$0xff] %v426
      %431 = vst [vmem:[#allocation2 + $0x38] sm:$0xff] %v427
      %v432 = vpack.c.bf16 %v272, %v270
      %v433 = vpack.c.bf16 %v273, %v271
      %v436 = vunpack.c.l.b16 %v432
      %v437 = vunpack.c.l.b16 %v433
      %v438 = vunpack.c.h.b16 %v432
      %v439 = vunpack.c.h.b16 %v433
      %v440 = vpack.c.b16 %v437, %v436
      %v441 = vpack.c.b16 %v439, %v438
      %444 = vst [vmem:[#allocation2 + $0x40] sm:$0xff] %v440
      %445 = vst [vmem:[#allocation2 + $0x48] sm:$0xff] %v441
      %446 = vrot.lane.b32.xlu0 %v270, 127
      %v447 = vpop.permute.xlu0 %446
      %448 = vrot.lane.b32.xlu0 %v272, 127
      %v449 = vpop.permute.xlu0 %448
      %450 = vrot.lane.b32.xlu0 %v271, 127
      %v451 = vpop.permute.xlu0 %450
      %452 = vrot.lane.b32.xlu0 %v273, 127
      %v453 = vpop.permute.xlu0 %452
      %vm454 = vcmp.lt.s32.totalorder %v283, 127
      %v455 = vsel %vm454, %v447, %v451
      %v456 = vsel %vm454, %v449, %v453
      %v457 = vsel %vm454, %v451, %v447
      %v458 = vsel %vm454, %v453, %v449
      %v459 = vlaneseq
      %v460 = vshrl.u32 %v459, 7
      %v461 = vsub.s32 5, %v460
      %v462 = vrot.slane %v266, %v461
      %v463 = vlaneseq
      %v464 = vshrl.u32 %v463, 7
      %v465 = vsub.s32 5, %v464
      %v466 = vrot.slane %v267, %v465
      %v467 = vmul.f32 %v455, %v462
      %v468 = vmul.f32 %v457, %v466
      %v469 = vmul.f32 %v456, %v462
      %v470 = vmul.f32 %v458, %v466
      %v471 = vpack.c.bf16 %v469, %v467
      %v472 = vpack.c.bf16 %v470, %v468
      %v475 = vunpack.c.l.b16 %v471
      %v476 = vunpack.c.l.b16 %v472
      %v477 = vunpack.c.h.b16 %v471
      %v478 = vunpack.c.h.b16 %v472
      %v479 = vpack.c.b16 %v476, %v475
      %v480 = vpack.c.b16 %v478, %v477
      %483 = vst [vmem:[#allocation2 + $0x50] sm:$0xff] %v479
      %484 = vst [vmem:[#allocation2 + $0x58] sm:$0xff] %v480
      %485 = vrot.lane.b32.xlu0 %v270, 113
      %v486 = vpop.permute.xlu0 %485
      %487 = vrot.lane.b32.xlu0 %v272, 113
      %v488 = vpop.permute.xlu0 %487
      %489 = vrot.lane.b32.xlu0 %v271, 113
      %v490 = vpop.permute.xlu0 %489
      %491 = vrot.lane.b32.xlu0 %v273, 113
      %v492 = vpop.permute.xlu0 %491
      %vm493 = vcmp.lt.s32.totalorder %v283, 113
      %v494 = vsel %vm493, %v486, %v490
      %v495 = vsel %vm493, %v488, %v492
      %v496 = vsel %vm493, %v490, %v486
      %v497 = vsel %vm493, %v492, %v488
      %v498 = vlaneseq
      %v499 = vshrl.u32 %v498, 7
      %v500 = vsub.s32 6, %v499
      %v501 = vrot.slane %v266, %v500
      %v502 = vlaneseq
      %v503 = vshrl.u32 %v502, 7
      %v504 = vsub.s32 6, %v503
      %v505 = vrot.slane %v267, %v504
      %v506 = vmul.f32 %v494, %v501
      %v507 = vmul.f32 %v496, %v505
      %v508 = vmul.f32 %v495, %v501
      %v509 = vmul.f32 %v497, %v505
      %v510 = vpack.c.bf16 %v508, %v506
      %v511 = vpack.c.bf16 %v509, %v507
      %v514 = vunpack.c.l.b16 %v510
      %v515 = vunpack.c.l.b16 %v511
      %v516 = vunpack.c.h.b16 %v510
      %v517 = vunpack.c.h.b16 %v511
      %v518 = vpack.c.b16 %v515, %v514
      %v519 = vpack.c.b16 %v517, %v516
      %522 = vst [vmem:[#allocation2 + $0x60] sm:$0xff] %v518
      %523 = vst [vmem:[#allocation2 + $0x68] sm:$0xff] %v519
      %524 = vrot.lane.b32.xlu0 %v270, 112
      %v525 = vpop.permute.xlu0 %524
      %526 = vrot.lane.b32.xlu0 %v272, 112
      %v527 = vpop.permute.xlu0 %526
      %528 = vrot.lane.b32.xlu0 %v271, 112
      %v529 = vpop.permute.xlu0 %528
      %530 = vrot.lane.b32.xlu0 %v273, 112
      %v531 = vpop.permute.xlu0 %530
      %vm532 = vcmp.lt.s32.totalorder %v283, 112
      %v533 = vsel %vm532, %v525, %v529
      %v534 = vsel %vm532, %v527, %v531
      %v535 = vsel %vm532, %v529, %v525
      %v536 = vsel %vm532, %v531, %v527
      %v537 = vlaneseq
      %v538 = vshrl.u32 %v537, 7
      %v539 = vsub.s32 7, %v538
      %v540 = vrot.slane %v266, %v539
      %v541 = vlaneseq
      %v542 = vshrl.u32 %v541, 7
      %v543 = vsub.s32 7, %v542
      %v544 = vrot.slane %v267, %v543
      %v545 = vmul.f32 %v533, %v540
      %v546 = vmul.f32 %v535, %v544
      %v547 = vmul.f32 %v534, %v540
      %v548 = vmul.f32 %v536, %v544
      %v549 = vpack.c.bf16 %v547, %v545
      %v550 = vpack.c.bf16 %v548, %v546
      %v553 = vunpack.c.l.b16 %v549
      %v554 = vunpack.c.l.b16 %v550
      %v555 = vunpack.c.h.b16 %v549
      %v556 = vunpack.c.h.b16 %v550
      %v557 = vpack.c.b16 %v554, %v553
      %v558 = vpack.c.b16 %v556, %v555
      %561 = vst [vmem:[#allocation2 + $0x70] sm:$0xff] %v557
      %562 = vst [vmem:[#allocation2 + $0x78] sm:$0xff] %v558
      %563 = vrot.lane.b32.xlu0 %v270, 111
      %v564 = vpop.permute.xlu0 %563
      %565 = vrot.lane.b32.xlu0 %v272, 111
      %v566 = vpop.permute.xlu0 %565
      %567 = vrot.lane.b32.xlu0 %v271, 111
      %v568 = vpop.permute.xlu0 %567
      %569 = vrot.lane.b32.xlu0 %v273, 111
      %v570 = vpop.permute.xlu0 %569
      %vm571 = vcmp.lt.s32.totalorder %v283, 111
      %v572 = vsel %vm571, %v564, %v568
      %v573 = vsel %vm571, %v566, %v570
      %v574 = vsel %vm571, %v568, %v564
      %v575 = vsel %vm571, %v570, %v566
      %v576 = vlaneseq
      %v577 = vshrl.u32 %v576, 7
      %v578 = vsub.s32 0, %v577
      %v579 = vrot.slane %v268, %v578
      %v580 = vlaneseq
      %v581 = vshrl.u32 %v580, 7
      %v582 = vsub.s32 0, %v581
      %v583 = vrot.slane %v269, %v582
      %v584 = vmul.f32 %v572, %v579
      %v585 = vmul.f32 %v574, %v583
      %v586 = vmul.f32 %v573, %v579
      %v587 = vmul.f32 %v575, %v583
      %v588 = vpack.c.bf16 %v586, %v584
      %v589 = vpack.c.bf16 %v587, %v585
      %v592 = vunpack.c.l.b16 %v588
      %v593 = vunpack.c.l.b16 %v589
      %v594 = vunpack.c.h.b16 %v588
      %v595 = vunpack.c.h.b16 %v589
      %v596 = vpack.c.b16 %v593, %v592
      %v597 = vpack.c.b16 %v595, %v594
      %600 = vst [vmem:[#allocation2 + $0x80] sm:$0xff] %v596
      %601 = vst [vmem:[#allocation2 + $0x88] sm:$0xff] %v597
      %v602 = vld [vmem:[%s4] sm:$0xff]
      %v603 = vld [vmem:[%s4 + $0x8] sm:$0xff]
      %v604 = vld [vmem:[#allocation2] sm:$0xff]
      %v605 = vld [vmem:[#allocation2 + $0x8] sm:$0xff]
      %v606 = vld [vmem:[#allocation2 + $0x10] sm:$0xff]
      %v607 = vld [vmem:[#allocation2 + $0x18] sm:$0xff]
      %v608 = vld [vmem:[#allocation2 + $0x20] sm:$0xff]
      %v609 = vld [vmem:[#allocation2 + $0x28] sm:$0xff]
      %v610 = vld [vmem:[#allocation2 + $0x30] sm:$0xff]
      %v611 = vld [vmem:[#allocation2 + $0x38] sm:$0xff]
      %v612 = vld [vmem:[#allocation2 + $0x40] sm:$0xff]
      %v613 = vld [vmem:[#allocation2 + $0x48] sm:$0xff]
      %v614 = vld [vmem:[#allocation2 + $0x50] sm:$0xff]
      %v615 = vld [vmem:[#allocation2 + $0x58] sm:$0xff]
      %v616 = vld [vmem:[#allocation2 + $0x60] sm:$0xff]
      %v617 = vld [vmem:[#allocation2 + $0x68] sm:$0xff]
      %v618 = vld [vmem:[#allocation2 + $0x70] sm:$0xff]
      %v619 = vld [vmem:[#allocation2 + $0x78] sm:$0xff]
      %v620 = vld [vmem:[#allocation2 + $0x80] sm:$0xff]
      %v621 = vld [vmem:[#allocation2 + $0x88] sm:$0xff]
      %v624 = vunpack.c.l.b16 %v602
      %v625 = vunpack.c.h.b16 %v602
      %v626 = vunpack.c.l.b16 %v603
      %v627 = vunpack.c.h.b16 %v603
      %v628 = vpack.c.b16 %v626, %v624
      %v629 = vpack.c.b16 %v627, %v625
      %v649 = vunpack.c.l.b16 %v604
      %v650 = vunpack.c.h.b16 %v604
      %v651 = vunpack.c.l.b16 %v605
      %v652 = vunpack.c.h.b16 %v605
      %v653 = vunpack.c.l.b16 %v606
      %v654 = vunpack.c.h.b16 %v606
      %v655 = vunpack.c.l.b16 %v607
      %v656 = vunpack.c.h.b16 %v607
      %v657 = vunpack.c.l.b16 %v608
      %v658 = vunpack.c.h.b16 %v608
      %v659 = vunpack.c.l.b16 %v609
      %v660 = vunpack.c.h.b16 %v609
      %v661 = vunpack.c.l.b16 %v610
      %v662 = vunpack.c.h.b16 %v610
      %v663 = vunpack.c.l.b16 %v611
      %v664 = vunpack.c.h.b16 %v611
      %v665 = vunpack.c.l.b16 %v612
      %v666 = vunpack.c.h.b16 %v612
      %v667 = vunpack.c.l.b16 %v613
      %v668 = vunpack.c.h.b16 %v613
      %v669 = vunpack.c.l.b16 %v614
      %v670 = vunpack.c.h.b16 %v614
      %v671 = vunpack.c.l.b16 %v615
      %v672 = vunpack.c.h.b16 %v615
      %v673 = vunpack.c.l.b16 %v616
      %v674 = vunpack.c.h.b16 %v616
      %v675 = vunpack.c.l.b16 %v617
      %v676 = vunpack.c.h.b16 %v617
      %v677 = vunpack.c.l.b16 %v618
      %v678 = vunpack.c.h.b16 %v618
      %v679 = vunpack.c.l.b16 %v619
      %v680 = vunpack.c.h.b16 %v619
      %v681 = vunpack.c.l.b16 %v620
      %v682 = vunpack.c.h.b16 %v620
      %v683 = vunpack.c.l.b16 %v621
      %v684 = vunpack.c.h.b16 %v621
      %v685 = vpack.c.b16 %v651, %v649
      %v686 = vpack.c.b16 %v652, %v650
      %v687 = vpack.c.b16 %v655, %v653
      %v688 = vpack.c.b16 %v656, %v654
      %v689 = vpack.c.b16 %v659, %v657
      %v690 = vpack.c.b16 %v660, %v658
      %v691 = vpack.c.b16 %v663, %v661
      %v692 = vpack.c.b16 %v664, %v662
      %v693 = vpack.c.b16 %v667, %v665
      %v694 = vpack.c.b16 %v668, %v666
      %v695 = vpack.c.b16 %v671, %v669
      %v696 = vpack.c.b16 %v672, %v670
      %v697 = vpack.c.b16 %v675, %v673
      %v698 = vpack.c.b16 %v676, %v674
      %v699 = vpack.c.b16 %v679, %v677
      %v700 = vpack.c.b16 %v680, %v678
      %v701 = vpack.c.b16 %v683, %v681
      %v702 = vpack.c.b16 %v684, %v682
      %vm721 = vcmask 130048
      %v723 = vsel %vm721, %v629, 0
      %725 = vmatprep.subr.bf16.mxu0 %v700
      %726 = vmatpush1.bf16.msra.mxu0 %v699
      %727 = vmatprep.subr.bf16.mxu0 %v698
      %728 = vmatpush1.bf16.msra.mxu0 %v697
      %729 = vmatprep.subr.bf16.mxu0 %v696
      %730 = vmatpush1.bf16.msra.mxu0 %v695
      %731 = vmatprep.subr.bf16.mxu0 %v694
      %732 = vmatpush1.bf16.msra.mxu0 %v693
      %733 = vmatprep.subr.bf16.mxu0 %v692
      %734 = vmatpush1.bf16.msra.mxu0 %v691
      %735 = vmatprep.subr.bf16.mxu0 %v690
      %736 = vmatpush1.bf16.msra.mxu0 %v689
      %737 = vmatprep.subr.bf16.mxu0 %v688
      %738 = vmatpush1.bf16.msra.mxu0 %v687
      %739 = vmatprep.subr.bf16.mxu0 %v686
      %740 = vmatpush1.bf16.msra.mxu0 %v685
      %741 = vmatprep.subr.bf16.mxu0 0
      %742 = vmatpush2.bf16.msra.mxu0 0
      %743 = vmatprep.subr.bf16.mxu0 0
      %744 = vmatpush2.bf16.msra.mxu0 0
      %745 = vmatprep.subr.bf16.mxu0 0
      %746 = vmatpush2.bf16.msra.mxu0 0
      %747 = vmatprep.subr.bf16.mxu0 0
      %748 = vmatpush2.bf16.msra.mxu0 0
      %749 = vmatprep.subr.bf16.mxu0 0
      %750 = vmatpush2.bf16.msra.mxu0 0
      %751 = vmatprep.subr.bf16.mxu0 0
      %752 = vmatpush2.bf16.msra.mxu0 0
      %753 = vmatprep.subr.bf16.mxu0 0
      %754 = vmatpush2.bf16.msra.mxu0 0
      %755 = vmatprep.subr.bf16.mxu0 %v702
      %756 = vmatpush2.bf16.msra.mxu0 %v701
      %757 = vmatprep.mubr.bf16.mxu0 %v723
      %758 = vmatmul.mubr.bf16.gmra.mxu0 %v628
      %v759 = vpop.f32.mrf.mxu0
      %v760 = vadd.f32 0.0, %v759
      %v761 = vpop.f32.mrf.mxu0
      %v762 = vadd.f32 0.0, %v761
      %v763 = vpop.f32.mrf.mxu0
      %v764 = vadd.f32 0.0, %v763
      %v765 = vpop.f32.mrf.mxu0
      %v766 = vadd.f32 0.0, %v765
      %767 = vdwg.mxu0
      %v768 = vpack.c.bf16 %v764, %v760
      %v769 = vpack.c.bf16 %v766, %v762
      %v772 = vunpack.c.l.b16 %v768
      %v773 = vunpack.c.l.b16 %v769
      %v774 = vunpack.c.h.b16 %v768
      %v775 = vunpack.c.h.b16 %v769
      %v776 = vpack.c.b16 %v773, %v772
      %v777 = vpack.c.b16 %v775, %v774
      %780 = vst [vmem:[%s259] sm:$0xff] %v776
      %781 = vst [vmem:[%s259 + $0x8] sm:$0xff] %v777
      %v782 = vadd.f32 %v760, %v762
      %783 = vadd.xlane.f32.xlu0 %v782
      %v784 = vpop.xlane.xlu0 %783
      %v785 = vadd.f32 %v764, %v766
      %786 = vadd.xlane.f32.xlu0 %v785
      %v787 = vpop.xlane.xlu0 %786
      %v788 = vmul.f32 %v760, %v760
      %v789 = vmul.f32 %v762, %v762
      %v790 = vmul.f32 %v764, %v764
      %v791 = vmul.f32 %v766, %v766
      %v792 = vadd.f32 %v788, %v789
      %793 = vadd.xlane.f32.xlu0 %v792
      %v794 = vpop.xlane.xlu0 %793
      %v795 = vadd.f32 %v790, %v791
      %796 = vadd.xlane.f32.xlu0 %v795
      %v797 = vpop.xlane.xlu0 %796
      %vm798 = vcmask 7168
      %v799 = vsel %vm798, %v784, %v794
      %v800 = vsel %vm798, %v787, %v797
      %v801 = vadd.f32 %v799, 0.0
      %v802 = vadd.f32 %v800, 0.0
      %vm803 = vcmask 15360
      %804 = vst.msk [vmem:[%s264] sm:$0xff] %vm803, %v801
      %805 = vst.msk [vmem:[%s264 + $0x8] sm:$0xff] %vm803, %v802
      %p806 = scmp.lt.s32.totalorder %s18, 1
      %s807 = scalar_select %p806, %s18, 1
      %s808 = smul.addr %s807, 4
      %s809 = smul.addr %s808, 4
      %s810 = scalar_lea.vmem %s5, %s809
      %p811 = scmp.lt.s32.totalorder %s18, 1
      %s812 = scalar_select %p811, %s18, 1
      %s813 = smul.addr %s812, 2
      %s814 = smul.addr %s813, 8
      %s815 = scalar_lea.vmem %s6, %s814
      // Predicated region
      $region41: #{resblock_forward.3} parent=39 // pred_check
        %p816 = pneg %p146
      $region42: #{resblock_forward.3} parent=39 // pred_check_branch
        %818 = sbr.rel (%p816) target = $region44
      $region43: #{resblock_forward.3} parent=39 // pred_region
        _
      $region44: #{resblock_forward.3} parent=39 // pred_fallthru
        _
      // Predicated region
      $region45: #{resblock_forward.3} parent=39 // pred_check
        %p819 = pneg %p172
      $region46: #{resblock_forward.3} parent=39 // pred_check_branch
        %821 = sbr.rel (%p819) target = $region48
      $region47: #{resblock_forward.3} parent=39 // pred_region
        _
      $region48: #{resblock_forward.3} parent=39 // pred_fallthru
        _
    $region40: #{resblock_forward.3} parent=5 // pred_fallthru
      _
    %p822 = scmp.le.s32.totalorder 2, %s13
    // Predicated region
    $region49: #{resblock_forward.3} parent=5 // pred_check
      %p823 = pneg %p822
    $region50: #{resblock_forward.3} parent=5 // pred_check_branch
      %825 = sbr.rel (%p823) target = $region52
    $region51: #{resblock_forward.3} parent=5 // pred_region
      %s826 = ssub.s32 %s13, 2
      // Predicated region
      $region53: #{resblock_forward.3} parent=51 // pred_check
        %p827 = pneg %p152
      $region54: #{resblock_forward.3} parent=51 // pred_check_branch
        %829 = sbr.rel (%p827) target = $region56
      $region55: #{resblock_forward.3} parent=51 // pred_region
        %p830 = scmp.lt.s32.totalorder %s19, 1
        %s831 = scalar_select %p830, %s19, 1
        %s832 = smul.addr %s831, 4
        %s833 = smul.addr %s832, 4
        %s834 = scalar_lea.vmem %s5, %s833
      $region56: #{resblock_forward.3} parent=51 // pred_fallthru
        _
      // Predicated region
      $region57: #{resblock_forward.3} parent=51 // pred_check
        %p835 = pneg %p178
      $region58: #{resblock_forward.3} parent=51 // pred_check_branch
        %837 = sbr.rel (%p835) target = $region60
      $region59: #{resblock_forward.3} parent=51 // pred_region
        %p838 = scmp.lt.s32.totalorder %s19, 1
        %s839 = scalar_select %p838, %s19, 1
        %s840 = smul.addr %s839, 2
        %s841 = smul.addr %s840, 8
        %s842 = scalar_lea.vmem %s6, %s841
      $region60: #{resblock_forward.3} parent=51 // pred_fallthru
        _
    $region52: #{resblock_forward.3} parent=5 // pred_fallthru
      _
  $region6: #{resblock_forward.3} parent=0 // loop_footer
    %s17 = sadd.s32 1, %s13
  $region7: #{resblock_forward.3} parent=0 // loop_footer_branch
    %12 = sbr.rel target = $region3
  $region8: #{resblock_forward.3} parent=0 // loop_exit
    _

// kernel: resblock_forward.4
$region0: #{resblock_forward.4}
  #allocation0 [shape = 'u32[]', space=smem, size = 0x4, offset = 0x4, fixed_abs, tag = 'smem constant byte address 0x4 - core index']
  #allocation1 [shape = 'u32[144,128]{1,0:T(1,128)}', space=vmem, size = 0x12000, scoped, tag = 'internal scratch']
  #allocation2 [shape = 'bf16[144,256]{1,0:T(8,128)(2,1)}', space=vmem, size = 0x12000, scoped, tag = 'scratch operand']
  %s0 = inlined_call_operand.vmem [shape: f32[16,1], index: 0, kind: input, shape index: {}]
  %s1 = inlined_call_operand.vmem [shape: f32[16,1], index: 1, kind: input, shape index: {}]
  %s2 = inlined_call_operand.vmem [shape: f32[9,256], index: 2, kind: input, shape index: {}]
  %s3 = inlined_call_operand.vmem [shape: bf16[2,16,256], index: 3, kind: input, shape index: {}]
  %s4 = inlined_call_operand.vmem [shape: bf16[8,144], index: 4, kind: input, shape index: {}]
  %s5 = inlined_call_operand.vmem [shape: f32[2,8,256], index: 5, kind: output, shape index: {0}]
  %s6 = inlined_call_operand.vmem [shape: f32[2,8,2], index: 6, kind: output, shape index: {1}]
  %7 = xla_tuple %s5, %s6
  %s8 = sld [smem:[#allocation0]]
  $region61: #{resblock_forward.4} parent=0
    _
  %s10 = ssub.s32 1, %s8
  %s11 = scalar_select 0, %s10, %s8
  loop: start=0, step=1, limit=4
  $region2: #{resblock_forward.4} parent=0 // loop_pre_header
    _
  $region3: #{resblock_forward.4} parent=0 // loop_header
    %s13 = sphi 0, %s17
    %p14 = scmp.ge.s32.totalorder %s13, 4
    %s21 = sphi 0, %s21
    %s23 = sphi 0, %s21
    %s24 = sphi 0, %s23
    %s38 = sphi 0, %s24
    %s42 = sphi 0, %s42
    %s44 = sphi 0, %s42
    %s45 = sphi 0, %s44
    %s59 = sphi 0, %s45
    %s63 = sphi 0, %s63
    %s65 = sphi 0, %s63
    %s66 = sphi 0, %s65
    %s80 = sphi 0, %s66
    %s86 = sphi 0, %s88
    %s89 = sphi 0, %s86
    %s90 = sphi 0, %s89
    %s106 = sphi 0, %s90
    %s110 = sphi 0, %s110
    %s112 = sphi 0, %s110
    %s113 = sphi 0, %s112
    %s127 = sphi 0, %s113
    %s133 = sphi 0, %s135
    %s136 = sphi 0, %s133
    %s137 = sphi 0, %s136
    %s153 = sphi 0, %s137
    %s159 = sphi 0, %s161
    %s162 = sphi 0, %s159
    %s163 = sphi 0, %s162
    %s179 = sphi 0, %s163
  $region4: #{resblock_forward.4} parent=0 // loop_header_branch
    %16 = sbr.rel (%p14) target = $region8
  $region5: #{resblock_forward.4} parent=0 // loop_body
    %s18 = ssub.s32 %s13, 1
    %s19 = ssub.s32 %s13, 2
    %s20 = sadd.s32 %s13, 1
    %s22 = sadd.s32 %s21, 1
    %p25 = scmp.eq.s32.totalorder %s13, 1
    %p26 = scmp.ne.s32.totalorder %s21, %s23
    %p27 = scmp.eq.s32.totalorder %s13, 0
    %p28 = por %p26, %p27
    %p29 = scmp.ne.s32.totalorder %s21, %s23
    %p30 = scmp.eq.s32.totalorder %s18, 1
    %p31 = por %p29, %p30
    %p32 = scmp.ne.s32.totalorder %s23, %s24
    %p33 = scmp.eq.s32.totalorder %s18, 0
    %p34 = por %p32, %p33
    %p35 = scmp.ne.s32.totalorder %s23, %s24
    %p36 = scmp.eq.s32.totalorder %s19, 1
    %p37 = por %p35, %p36
    %p39 = scmp.ne.s32.totalorder %s24, %s38
    %p40 = scmp.eq.s32.totalorder %s19, 0
    %p41 = por %p39, %p40
    %s43 = sadd.s32 %s42, 1
    %p46 = scmp.eq.s32.totalorder %s13, 1
    %p47 = scmp.ne.s32.totalorder %s42, %s44
    %p48 = scmp.eq.s32.totalorder %s13, 0
    %p49 = por %p47, %p48
    %p50 = scmp.ne.s32.totalorder %s42, %s44
    %p51 = scmp.eq.s32.totalorder %s18, 1
    %p52 = por %p50, %p51
    %p53 = scmp.ne.s32.totalorder %s44, %s45
    %p54 = scmp.eq.s32.totalorder %s18, 0
    %p55 = por %p53, %p54
    %p56 = scmp.ne.s32.totalorder %s44, %s45
    %p57 = scmp.eq.s32.totalorder %s19, 1
    %p58 = por %p56, %p57
    %p60 = scmp.ne.s32.totalorder %s45, %s59
    %p61 = scmp.eq.s32.totalorder %s19, 0
    %p62 = por %p60, %p61
    %s64 = sadd.s32 %s63, 1
    %p67 = scmp.eq.s32.totalorder %s13, 1
    %p68 = scmp.ne.s32.totalorder %s63, %s65
    %p69 = scmp.eq.s32.totalorder %s13, 0
    %p70 = por %p68, %p69
    %p71 = scmp.ne.s32.totalorder %s63, %s65
    %p72 = scmp.eq.s32.totalorder %s18, 1
    %p73 = por %p71, %p72
    %p74 = scmp.ne.s32.totalorder %s65, %s66
    %p75 = scmp.eq.s32.totalorder %s18, 0
    %p76 = por %p74, %p75
    %p77 = scmp.ne.s32.totalorder %s65, %s66
    %p78 = scmp.eq.s32.totalorder %s19, 1
    %p79 = por %p77, %p78
    %p81 = scmp.ne.s32.totalorder %s66, %s80
    %p82 = scmp.eq.s32.totalorder %s19, 0
    %p83 = por %p81, %p82
    %s84 = ssub.s32 %s13, %s20
    %p85 = scmp.eq.s32.totalorder %s84, 0
    %s87 = sadd.s32 %s86, 1
    %s88 = scalar_select %p85, %s86, %s87
    %p91 = pneg %p85
    %p92 = scmp.eq.s32.totalorder %s13, 1
    %p93 = por %p91, %p92
    %p94 = scmp.ne.s32.totalorder %s86, %s89
    %p95 = scmp.eq.s32.totalorder %s13, 0
    %p96 = por %p94, %p95
    %p97 = scmp.ne.s32.totalorder %s86, %s89
    %p98 = scmp.eq.s32.totalorder %s18, 1
    %p99 = por %p97, %p98
    %p100 = scmp.ne.s32.totalorder %s89, %s90
    %p101 = scmp.eq.s32.totalorder %s18, 0
    %p102 = por %p100, %p101
    %p103 = scmp.ne.s32.totalorder %s89, %s90
    %p104 = scmp.eq.s32.totalorder %s19, 1
    %p105 = por %p103, %p104
    %p107 = scmp.ne.s32.totalorder %s90, %s106
    %p108 = scmp.eq.s32.totalorder %s19, 0
    %p109 = por %p107, %p108
    %s111 = sadd.s32 %s110, 1
    %p114 = scmp.eq.s32.totalorder %s13, 1
    %p115 = scmp.ne.s32.totalorder %s110, %s112
    %p116 = scmp.eq.s32.totalorder %s13, 0
    %p117 = por %p115, %p116
    %p118 = scmp.ne.s32.totalorder %s110, %s112
    %p119 = scmp.eq.s32.totalorder %s18, 1
    %p120 = por %p118, %p119
    %p121 = scmp.ne.s32.totalorder %s112, %s113
    %p122 = scmp.eq.s32.totalorder %s18, 0
    %p123 = por %p121, %p122
    %p124 = scmp.ne.s32.totalorder %s112, %s113
    %p125 = scmp.eq.s32.totalorder %s19, 1
    %p126 = por %p124, %p125
    %p128 = scmp.ne.s32.totalorder %s113, %s127
    %p129 = scmp.eq.s32.totalorder %s19, 0
    %p130 = por %p128, %p129
    %s131 = ssub.s32 %s13, %s20
    %p132 = scmp.eq.s32.totalorder %s131, 0
    %s134 = sadd.s32 %s133, 1
    %s135 = scalar_select %p132, %s133, %s134
    %p138 = pneg %p132
    %p139 = scmp.eq.s32.totalorder %s13, 1
    %p140 = por %p138, %p139
    %p141 = scmp.ne.s32.totalorder %s133, %s136
    %p142 = scmp.eq.s32.totalorder %s13, 0
    %p143 = por %p141, %p142
    %p144 = scmp.ne.s32.totalorder %s133, %s136
    %p145 = scmp.eq.s32.totalorder %s18, 1
    %p146 = por %p144, %p145
    %p147 = scmp.ne.s32.totalorder %s136, %s137
    %p148 = scmp.eq.s32.totalorder %s18, 0
    %p149 = por %p147, %p148
    %p150 = scmp.ne.s32.totalorder %s136, %s137
    %p151 = scmp.eq.s32.totalorder %s19, 1
    %p152 = por %p150, %p151
    %p154 = scmp.ne.s32.totalorder %s137, %s153
    %p155 = scmp.eq.s32.totalorder %s19, 0
    %p156 = por %p154, %p155
    %s157 = ssub.s32 %s13, %s20
    %p158 = scmp.eq.s32.totalorder %s157, 0
    %s160 = sadd.s32 %s159, 1
    %s161 = scalar_select %p158, %s159, %s160
    %p164 = pneg %p158
    %p165 = scmp.eq.s32.totalorder %s13, 1
    %p166 = por %p164, %p165
    %p167 = scmp.ne.s32.totalorder %s159, %s162
    %p168 = scmp.eq.s32.totalorder %s13, 0
    %p169 = por %p167, %p168
    %p170 = scmp.ne.s32.totalorder %s159, %s162
    %p171 = scmp.eq.s32.totalorder %s18, 1
    %p172 = por %p170, %p171
    %p173 = scmp.ne.s32.totalorder %s162, %s163
    %p174 = scmp.eq.s32.totalorder %s18, 0
    %p175 = por %p173, %p174
    %p176 = scmp.ne.s32.totalorder %s162, %s163
    %p177 = scmp.eq.s32.totalorder %s19, 1
    %p178 = por %p176, %p177
    %p180 = scmp.ne.s32.totalorder %s163, %s179
    %p181 = scmp.eq.s32.totalorder %s19, 0
    %p182 = por %p180, %p181
    %p183 = scmp.le.s32.totalorder 1, %s13
    %p184 = scmp.lt.s32.totalorder %s13, 3
    %p185 = pnand %p183, %p184
    %p186 = pneg %p185
    // Predicated region
    $region9: #{resblock_forward.4} parent=5 // pred_check
      _
    $region10: #{resblock_forward.4} parent=5 // pred_check_branch
      %188 = sbr.rel (%p185) target = $region12
    $region11: #{resblock_forward.4} parent=5 // pred_region
      %s189 = ssub.s32 %s13, 1
      // Predicated region
      $region13: #{resblock_forward.4} parent=11 // pred_check
        %p190 = pneg %p34
      $region14: #{resblock_forward.4} parent=11 // pred_check_branch
        %192 = sbr.rel (%p190) target = $region16
      $region15: #{resblock_forward.4} parent=11 // pred_region
        _
      $region16: #{resblock_forward.4} parent=11 // pred_fallthru
        _
      // Predicated region
      $region17: #{resblock_forward.4} parent=11 // pred_check
        %p193 = pneg %p55
      $region18: #{resblock_forward.4} parent=11 // pred_check_branch
        %195 = sbr.rel (%p193) target = $region20
      $region19: #{resblock_forward.4} parent=11 // pred_region
        _
      $region20: #{resblock_forward.4} parent=11 // pred_fallthru
        _
      // Predicated region
      $region21: #{resblock_forward.4} parent=11 // pred_check
        %p196 = pneg %p76
      $region22: #{resblock_forward.4} parent=11 // pred_check_branch
        %198 = sbr.rel (%p196) target = $region24
      $region23: #{resblock_forward.4} parent=11 // pred_region
        _
      $region24: #{resblock_forward.4} parent=11 // pred_fallthru
        _
      // Predicated region
      $region25: #{resblock_forward.4} parent=11 // pred_check
        %p199 = pneg %p123
      $region26: #{resblock_forward.4} parent=11 // pred_check_branch
        %201 = sbr.rel (%p199) target = $region28
      $region27: #{resblock_forward.4} parent=11 // pred_region
        _
      $region28: #{resblock_forward.4} parent=11 // pred_fallthru
        _
    $region12: #{resblock_forward.4} parent=5 // pred_fallthru
      _
    %p202 = scmp.lt.s32.totalorder %s13, 2
    // Predicated region
    $region29: #{resblock_forward.4} parent=5 // pred_check
      %p203 = pneg %p202
    $region30: #{resblock_forward.4} parent=5 // pred_check_branch
      %205 = sbr.rel (%p203) target = $region32
    $region31: #{resblock_forward.4} parent=5 // pred_region
      // Predicated region
      $region33: #{resblock_forward.4} parent=31 // pred_check
        %p206 = pneg %p96
      $region34: #{resblock_forward.4} parent=31 // pred_check_branch
        %208 = sbr.rel (%p206) target = $region36
      $region35: #{resblock_forward.4} parent=31 // pred_region
        %p209 = scmp.lt.s32.totalorder %s13, 1
        %s210 = scalar_select %p209, %s13, 1
        %s211 = smul.addr %s210, 4
        %s212 = smul.addr %s211, 4
        %s213 = scalar_lea.vmem %s3, %s212
      $region36: #{resblock_forward.4} parent=31 // pred_fallthru
        _
    $region32: #{resblock_forward.4} parent=5 // pred_fallthru
      _
    %p214 = scmp.le.s32.totalorder 1, %s13
    %p215 = scmp.lt.s32.totalorder %s13, 3
    %p216 = pnand %p214, %p215
    %p217 = pneg %p216
    // Predicated region
    $region37: #{resblock_forward.4} parent=5 // pred_check
      _
    $region38: #{resblock_forward.4} parent=5 // pred_check_branch
      %219 = sbr.rel (%p216) target = $region40
    $region39: #{resblock_forward.4} parent=5 // pred_region
      %s220 = ssub.s32 %s13, 1
      %p221 = pneg %p34
      %p222 = pneg %p31
      %p223 = pneg %p55
      %p224 = pneg %p52
      %p225 = pneg %p76
      %p226 = pneg %p73
      %p227 = scmp.lt.s32.totalorder %s18, 1
      %s228 = scalar_select %p227, %s18, 1
      %s229 = smul.addr %s228, 4
      %s230 = smul.addr %s229, 4
      %s231 = scalar_lea.vmem %s3, %s230
      %p232 = pneg %p102
      %p233 = pneg %p99
      %p234 = pneg %p123
      %p235 = pneg %p120
      %p236 = pneg %p149
      %p237 = pneg %p146
      %p238 = scmp.lt.s32.totalorder %s18, 1
      %s239 = scalar_select %p238, %s18, 1
      %s240 = smul.addr %s239, 2
      %s241 = smul.addr %s240, 8
      %s242 = scalar_lea.vmem %s5, %s241
      %p243 = pneg %p175
      %p244 = pneg %p172
      %p245 = scmp.lt.s32.totalorder %s18, 1
      %s246 = scalar_select %p245, %s18, 1
      %s247 = smul.addr %s246, 8
      %s248 = scalar_lea.vmem %s6, %s247
      %p249 = scmp.lt.s32.totalorder %s18, 1
      %s250 = scalar_select %p249, %s18, 1
      %s251 = smul.addr %s250, 4
      %s252 = smul.addr %s251, 4
      %s253 = scalar_lea.vmem %s3, %s252
      %p254 = scmp.lt.s32.totalorder %s18, 1
      %s255 = scalar_select %p254, %s18, 1
      %s256 = smul.addr %s255, 2
      %s257 = smul.addr %s256, 8
      %s258 = scalar_lea.vmem %s5, %s257
      %p259 = scmp.lt.s32.totalorder %s18, 1
      %s260 = scalar_select %p259, %s18, 1
      %s261 = smul.addr %s260, 8
      %s262 = scalar_lea.vmem %s6, %s261
      %v264 = vld [vmem:[%s2] sm:$0xff]
      %v265 = vld [vmem:[%s2 + $0x8] sm:$0xff]
      %v266 = vld [vmem:[%s2 + $0x10] sm:$0x1]
      %v267 = vld [vmem:[%s2 + $0x18] sm:$0x1]
      %v268 = vld [vmem:[%s253] sm:$0xff]
      %v269 = vld [vmem:[%s253 + $0x8] sm:$0xff]
      %v270 = vunpack.c.l.bf16 %v268
      %v271 = vunpack.c.h.bf16 %v268
      %v272 = vunpack.c.l.bf16 %v269
      %v273 = vunpack.c.h.bf16 %v269
      %v274 = vld [vmem:[%s0] sm:$0xff]
      %v275 = vld [vmem:[%s0 + $0x8] sm:$0xff]
      %277 = vset.pattern.permute.xlu0 0
      %278 = vperm.xlu0 %277, %v274
      %v279 = vpop.permute.xlu0 %278
      %282 = vset.pattern.permute.xlu0 0
      %283 = vperm.xlu0 %282, %v275
      %v284 = vpop.permute.xlu0 %283
      %v286 = vmul.f32 %v270, %v279
      %v287 = vmul.f32 %v271, %v279
      %v288 = vmul.f32 %v272, %v284
      %v289 = vmul.f32 %v273, %v284
      %v290 = vld [vmem:[%s1] sm:$0xff]
      %v291 = vld [vmem:[%s1 + $0x8] sm:$0xff]
      %293 = vset.pattern.permute.xlu0 0
      %294 = vperm.xlu0 %293, %v290
      %v295 = vpop.permute.xlu0 %294
      %298 = vset.pattern.permute.xlu0 0
      %299 = vperm.xlu0 %298, %v291
      %v300 = vpop.permute.xlu0 %299
      %v302 = vadd.f32 %v286, %v295
      %v303 = vadd.f32 %v287, %v295
      %v304 = vadd.f32 %v288, %v300
      %v305 = vadd.f32 %v289, %v300
      %v306 = vmax.f32 %v302, 0.0
      %v307 = vmax.f32 %v303, 0.0
      %v308 = vmax.f32 %v304, 0.0
      %v309 = vmax.f32 %v305, 0.0
      %v310 = vmin.f32 %v306, 6.0
      %v311 = vmin.f32 %v307, 6.0
      %v312 = vmin.f32 %v308, 6.0
      %v313 = vmin.f32 %v309, 6.0
      %314 = vrot.lane.b32.xlu0 %v310, 17
      %v315 = vpop.permute.xlu0 %314
      %316 = vrot.lane.b32.xlu0 %v312, 17
      %v317 = vpop.permute.xlu0 %316
      %318 = vrot.lane.b32.xlu0 %v311, 17
      %v319 = vpop.permute.xlu0 %318
      %320 = vrot.lane.b32.xlu0 %v313, 17
      %v321 = vpop.permute.xlu0 %320
      %v322 = vlaneseq
      %v323 = vand.u32 %v322, 127
      %vm324 = vcmp.lt.s32.totalorder %v323, 17
      %v325 = vsel %vm324, %v315, %v319
      %v326 = vsel %vm324, %v317, %v321
      %v327 = vsel %vm324, %v319, %v315
      %v328 = vsel %vm324, %v321, %v317
      %v329 = vlaneseq
      %v330 = vshrl.u32 %v329, 7
      %v331 = vsub.s32 0, %v330
      %v332 = vrot.slane %v264, %v331
      %v333 = vlaneseq
      %v334 = vshrl.u32 %v333, 7
      %v335 = vsub.s32 0, %v334
      %v336 = vrot.slane %v265, %v335
      %v337 = vmul.f32 %v327, %v332
      %v338 = vmul.f32 %v325, %v336
      %v339 = vmul.f32 %v328, %v332
      %v340 = vmul.f32 %v326, %v336
      %v341 = vpack.c.bf16 %v339, %v337
      %v342 = vpack.c.bf16 %v340, %v338
      %v345 = vunpack.c.l.b16 %v341
      %v346 = vunpack.c.l.b16 %v342
      %v347 = vunpack.c.h.b16 %v341
      %v348 = vunpack.c.h.b16 %v342
      %v349 = vpack.c.b16 %v346, %v345
      %v350 = vpack.c.b16 %v348, %v347
      %353 = vst [vmem:[#allocation2] sm:$0xff] %v349
      %354 = vst [vmem:[#allocation2 + $0x8] sm:$0xff] %v350
      %355 = vrot.lane.b32.xlu0 %v310, 16
      %v356 = vpop.permute.xlu0 %355
      %357 = vrot.lane.b32.xlu0 %v312, 16
      %v358 = vpop.permute.xlu0 %357
      %359 = vrot.lane.b32.xlu0 %v311, 16
      %v360 = vpop.permute.xlu0 %359
      %361 = vrot.lane.b32.xlu0 %v313, 16
      %v362 = vpop.permute.xlu0 %361
      %vm363 = vcmp.lt.s32.totalorder %v323, 16
      %v364 = vsel %vm363, %v356, %v360
      %v365 = vsel %vm363, %v358, %v362
      %v366 = vsel %vm363, %v360, %v356
      %v367 = vsel %vm363, %v362, %v358
      %v368 = vlaneseq
      %v369 = vshrl.u32 %v368, 7
      %v370 = vsub.s32 1, %v369
      %v371 = vrot.slane %v264, %v370
      %v372 = vlaneseq
      %v373 = vshrl.u32 %v372, 7
      %v374 = vsub.s32 1, %v373
      %v375 = vrot.slane %v265, %v374
      %v376 = vmul.f32 %v366, %v371
      %v377 = vmul.f32 %v364, %v375
      %v378 = vmul.f32 %v367, %v371
      %v379 = vmul.f32 %v365, %v375
      %v380 = vpack.c.bf16 %v378, %v376
      %v381 = vpack.c.bf16 %v379, %v377
      %v384 = vunpack.c.l.b16 %v380
      %v385 = vunpack.c.l.b16 %v381
      %v386 = vunpack.c.h.b16 %v380
      %v387 = vunpack.c.h.b16 %v381
      %v388 = vpack.c.b16 %v385, %v384
      %v389 = vpack.c.b16 %v387, %v386
      %392 = vst [vmem:[#allocation2 + $0x10] sm:$0xff] %v388
      %393 = vst [vmem:[#allocation2 + $0x18] sm:$0xff] %v389
      %394 = vrot.lane.b32.xlu0 %v310, 15
      %v395 = vpop.permute.xlu0 %394
      %396 = vrot.lane.b32.xlu0 %v312, 15
      %v397 = vpop.permute.xlu0 %396
      %398 = vrot.lane.b32.xlu0 %v311, 15
      %v399 = vpop.permute.xlu0 %398
      %400 = vrot.lane.b32.xlu0 %v313, 15
      %v401 = vpop.permute.xlu0 %400
      %vm402 = vcmp.lt.s32.totalorder %v323, 15
      %v403 = vsel %vm402, %v395, %v399
      %v404 = vsel %vm402, %v397, %v401
      %v405 = vsel %vm402, %v399, %v395
      %v406 = vsel %vm402, %v401, %v397
      %v407 = vlaneseq
      %v408 = vshrl.u32 %v407, 7
      %v409 = vsub.s32 2, %v408
      %v410 = vrot.slane %v264, %v409
      %v411 = vlaneseq
      %v412 = vshrl.u32 %v411, 7
      %v413 = vsub.s32 2, %v412
      %v414 = vrot.slane %v265, %v413
      %v415 = vmul.f32 %v405, %v410
      %v416 = vmul.f32 %v403, %v414
      %v417 = vmul.f32 %v406, %v410
      %v418 = vmul.f32 %v404, %v414
      %v419 = vpack.c.bf16 %v417, %v415
      %v420 = vpack.c.bf16 %v418, %v416
      %v423 = vunpack.c.l.b16 %v419
      %v424 = vunpack.c.l.b16 %v420
      %v425 = vunpack.c.h.b16 %v419
      %v426 = vunpack.c.h.b16 %v420
      %v427 = vpack.c.b16 %v424, %v423
      %v428 = vpack.c.b16 %v426, %v425
      %431 = vst [vmem:[#allocation2 + $0x20] sm:$0xff] %v427
      %432 = vst [vmem:[#allocation2 + $0x28] sm:$0xff] %v428
      %433 = vrot.lane.b32.xlu0 %v310, 1
      %v434 = vpop.permute.xlu0 %433
      %435 = vrot.lane.b32.xlu0 %v312, 1
      %v436 = vpop.permute.xlu0 %435
      %437 = vrot.lane.b32.xlu0 %v311, 1
      %v438 = vpop.permute.xlu0 %437
      %439 = vrot.lane.b32.xlu0 %v313, 1
      %v440 = vpop.permute.xlu0 %439
      %vm441 = vcmp.lt.s32.totalorder %v323, 1
      %v442 = vsel %vm441, %v434, %v438
      %v443 = vsel %vm441, %v436, %v440
      %v444 = vsel %vm441, %v438, %v434
      %v445 = vsel %vm441, %v440, %v436
      %v446 = vlaneseq
      %v447 = vshrl.u32 %v446, 7
      %v448 = vsub.s32 3, %v447
      %v449 = vrot.slane %v264, %v448
      %v450 = vlaneseq
      %v451 = vshrl.u32 %v450, 7
      %v452 = vsub.s32 3, %v451
      %v453 = vrot.slane %v265, %v452
      %v454 = vmul.f32 %v444, %v449
      %v455 = vmul.f32 %v442, %v453
      %v456 = vmul.f32 %v445, %v449
      %v457 = vmul.f32 %v443, %v453
      %v458 = vpack.c.bf16 %v456, %v454
      %v459 = vpack.c.bf16 %v457, %v455
      %v462 = vunpack.c.l.b16 %v458
      %v463 = vunpack.c.l.b16 %v459
      %v464 = vunpack.c.h.b16 %v458
      %v465 = vunpack.c.h.b16 %v459
      %v466 = vpack.c.b16 %v463, %v462
      %v467 = vpack.c.b16 %v465, %v464
      %470 = vst [vmem:[#allocation2 + $0x30] sm:$0xff] %v466
      %471 = vst [vmem:[#allocation2 + $0x38] sm:$0xff] %v467
      %v472 = vpack.c.bf16 %v312, %v310
      %v473 = vpack.c.bf16 %v313, %v311
      %v476 = vunpack.c.l.b16 %v472
      %v477 = vunpack.c.l.b16 %v473
      %v478 = vunpack.c.h.b16 %v472
      %v479 = vunpack.c.h.b16 %v473
      %v480 = vpack.c.b16 %v477, %v476
      %v481 = vpack.c.b16 %v479, %v478
      %484 = vst [vmem:[#allocation2 + $0x40] sm:$0xff] %v480
      %485 = vst [vmem:[#allocation2 + $0x48] sm:$0xff] %v481
      %486 = vrot.lane.b32.xlu0 %v310, 127
      %v487 = vpop.permute.xlu0 %486
      %488 = vrot.lane.b32.xlu0 %v312, 127
      %v489 = vpop.permute.xlu0 %488
      %490 = vrot.lane.b32.xlu0 %v311, 127
      %v491 = vpop.permute.xlu0 %490
      %492 = vrot.lane.b32.xlu0 %v313, 127
      %v493 = vpop.permute.xlu0 %492
      %vm494 = vcmp.lt.s32.totalorder %v323, 127
      %v495 = vsel %vm494, %v487, %v491
      %v496 = vsel %vm494, %v489, %v493
      %v497 = vsel %vm494, %v491, %v487
      %v498 = vsel %vm494, %v493, %v489
      %v499 = vlaneseq
      %v500 = vshrl.u32 %v499, 7
      %v501 = vsub.s32 5, %v500
      %v502 = vrot.slane %v264, %v501
      %v503 = vlaneseq
      %v504 = vshrl.u32 %v503, 7
      %v505 = vsub.s32 5, %v504
      %v506 = vrot.slane %v265, %v505
      %v507 = vmul.f32 %v495, %v502
      %v508 = vmul.f32 %v497, %v506
      %v509 = vmul.f32 %v496, %v502
      %v510 = vmul.f32 %v498, %v506
      %v511 = vpack.c.bf16 %v509, %v507
      %v512 = vpack.c.bf16 %v510, %v508
      %v515 = vunpack.c.l.b16 %v511
      %v516 = vunpack.c.l.b16 %v512
      %v517 = vunpack.c.h.b16 %v511
      %v518 = vunpack.c.h.b16 %v512
      %v519 = vpack.c.b16 %v516, %v515
      %v520 = vpack.c.b16 %v518, %v517
      %523 = vst [vmem:[#allocation2 + $0x50] sm:$0xff] %v519
      %524 = vst [vmem:[#allocation2 + $0x58] sm:$0xff] %v520
      %525 = vrot.lane.b32.xlu0 %v310, 113
      %v526 = vpop.permute.xlu0 %525
      %527 = vrot.lane.b32.xlu0 %v312, 113
      %v528 = vpop.permute.xlu0 %527
      %529 = vrot.lane.b32.xlu0 %v311, 113
      %v530 = vpop.permute.xlu0 %529
      %531 = vrot.lane.b32.xlu0 %v313, 113
      %v532 = vpop.permute.xlu0 %531
      %vm533 = vcmp.lt.s32.totalorder %v323, 113
      %v534 = vsel %vm533, %v526, %v530
      %v535 = vsel %vm533, %v528, %v532
      %v536 = vsel %vm533, %v530, %v526
      %v537 = vsel %vm533, %v532, %v528
      %v538 = vlaneseq
      %v539 = vshrl.u32 %v538, 7
      %v540 = vsub.s32 6, %v539
      %v541 = vrot.slane %v264, %v540
      %v542 = vlaneseq
      %v543 = vshrl.u32 %v542, 7
      %v544 = vsub.s32 6, %v543
      %v545 = vrot.slane %v265, %v544
      %v546 = vmul.f32 %v534, %v541
      %v547 = vmul.f32 %v536, %v545
      %v548 = vmul.f32 %v535, %v541
      %v549 = vmul.f32 %v537, %v545
      %v550 = vpack.c.bf16 %v548, %v546
      %v551 = vpack.c.bf16 %v549, %v547
      %v554 = vunpack.c.l.b16 %v550
      %v555 = vunpack.c.l.b16 %v551
      %v556 = vunpack.c.h.b16 %v550
      %v557 = vunpack.c.h.b16 %v551
      %v558 = vpack.c.b16 %v555, %v554
      %v559 = vpack.c.b16 %v557, %v556
      %562 = vst [vmem:[#allocation2 + $0x60] sm:$0xff] %v558
      %563 = vst [vmem:[#allocation2 + $0x68] sm:$0xff] %v559
      %564 = vrot.lane.b32.xlu0 %v310, 112
      %v565 = vpop.permute.xlu0 %564
      %566 = vrot.lane.b32.xlu0 %v312, 112
      %v567 = vpop.permute.xlu0 %566
      %568 = vrot.lane.b32.xlu0 %v311, 112
      %v569 = vpop.permute.xlu0 %568
      %570 = vrot.lane.b32.xlu0 %v313, 112
      %v571 = vpop.permute.xlu0 %570
      %vm572 = vcmp.lt.s32.totalorder %v323, 112
      %v573 = vsel %vm572, %v565, %v569
      %v574 = vsel %vm572, %v567, %v571
      %v575 = vsel %vm572, %v569, %v565
      %v576 = vsel %vm572, %v571, %v567
      %v577 = vlaneseq
      %v578 = vshrl.u32 %v577, 7
      %v579 = vsub.s32 7, %v578
      %v580 = vrot.slane %v264, %v579
      %v581 = vlaneseq
      %v582 = vshrl.u32 %v581, 7
      %v583 = vsub.s32 7, %v582
      %v584 = vrot.slane %v265, %v583
      %v585 = vmul.f32 %v573, %v580
      %v586 = vmul.f32 %v575, %v584
      %v587 = vmul.f32 %v574, %v580
      %v588 = vmul.f32 %v576, %v584
      %v589 = vpack.c.bf16 %v587, %v585
      %v590 = vpack.c.bf16 %v588, %v586
      %v593 = vunpack.c.l.b16 %v589
      %v594 = vunpack.c.l.b16 %v590
      %v595 = vunpack.c.h.b16 %v589
      %v596 = vunpack.c.h.b16 %v590
      %v597 = vpack.c.b16 %v594, %v593
      %v598 = vpack.c.b16 %v596, %v595
      %601 = vst [vmem:[#allocation2 + $0x70] sm:$0xff] %v597
      %602 = vst [vmem:[#allocation2 + $0x78] sm:$0xff] %v598
      %603 = vrot.lane.b32.xlu0 %v310, 111
      %v604 = vpop.permute.xlu0 %603
      %605 = vrot.lane.b32.xlu0 %v312, 111
      %v606 = vpop.permute.xlu0 %605
      %607 = vrot.lane.b32.xlu0 %v311, 111
      %v608 = vpop.permute.xlu0 %607
      %609 = vrot.lane.b32.xlu0 %v313, 111
      %v610 = vpop.permute.xlu0 %609
      %vm611 = vcmp.lt.s32.totalorder %v323, 111
      %v612 = vsel %vm611, %v604, %v608
      %v613 = vsel %vm611, %v606, %v610
      %v614 = vsel %vm611, %v608, %v604
      %v615 = vsel %vm611, %v610, %v606
      %v616 = vlaneseq
      %v617 = vshrl.u32 %v616, 7
      %v618 = vsub.s32 0, %v617
      %v619 = vrot.slane %v266, %v618
      %v620 = vlaneseq
      %v621 = vshrl.u32 %v620, 7
      %v622 = vsub.s32 0, %v621
      %v623 = vrot.slane %v267, %v622
      %v624 = vmul.f32 %v612, %v619
      %v625 = vmul.f32 %v614, %v623
      %v626 = vmul.f32 %v613, %v619
      %v627 = vmul.f32 %v615, %v623
      %v628 = vpack.c.bf16 %v626, %v624
      %v629 = vpack.c.bf16 %v627, %v625
      %v632 = vunpack.c.l.b16 %v628
      %v633 = vunpack.c.l.b16 %v629
      %v634 = vunpack.c.h.b16 %v628
      %v635 = vunpack.c.h.b16 %v629
      %v636 = vpack.c.b16 %v633, %v632
      %v637 = vpack.c.b16 %v635, %v634
      %640 = vst [vmem:[#allocation2 + $0x80] sm:$0xff] %v636
      %641 = vst [vmem:[#allocation2 + $0x88] sm:$0xff] %v637
      %v642 = vld [vmem:[%s4] sm:$0xff]
      %v643 = vld [vmem:[#allocation2] sm:$0xff]
      %v644 = vld [vmem:[#allocation2 + $0x8] sm:$0xff]
      %v645 = vld [vmem:[#allocation2 + $0x10] sm:$0xff]
      %v646 = vld [vmem:[#allocation2 + $0x18] sm:$0xff]
      %v647 = vld [vmem:[#allocation2 + $0x20] sm:$0xff]
      %v648 = vld [vmem:[#allocation2 + $0x28] sm:$0xff]
      %v649 = vld [vmem:[#allocation2 + $0x30] sm:$0xff]
      %v650 = vld [vmem:[#allocation2 + $0x38] sm:$0xff]
      %v651 = vld [vmem:[#allocation2 + $0x40] sm:$0xff]
      %v652 = vld [vmem:[#allocation2 + $0x48] sm:$0xff]
      %v653 = vld [vmem:[#allocation2 + $0x50] sm:$0xff]
      %v654 = vld [vmem:[#allocation2 + $0x58] sm:$0xff]
      %v655 = vld [vmem:[#allocation2 + $0x60] sm:$0xff]
      %v656 = vld [vmem:[#allocation2 + $0x68] sm:$0xff]
      %v657 = vld [vmem:[#allocation2 + $0x70] sm:$0xff]
      %v658 = vld [vmem:[#allocation2 + $0x78] sm:$0xff]
      %v659 = vld [vmem:[#allocation2 + $0x80] sm:$0xff]
      %v660 = vld [vmem:[#allocation2 + $0x88] sm:$0xff]
      %v662 = vunpack.c.l.b16 %v642
      %v663 = vunpack.c.h.b16 %v642
      %v664 = vpack.c.b16 %v662, %v662
      %v665 = vpack.c.b16 %v663, %v663
      %v685 = vunpack.c.l.b16 %v643
      %v686 = vunpack.c.h.b16 %v643
      %v687 = vunpack.c.l.b16 %v644
      %v688 = vunpack.c.h.b16 %v644
      %v689 = vunpack.c.l.b16 %v645
      %v690 = vunpack.c.h.b16 %v645
      %v691 = vunpack.c.l.b16 %v646
      %v692 = vunpack.c.h.b16 %v646
      %v693 = vunpack.c.l.b16 %v647
      %v694 = vunpack.c.h.b16 %v647
      %v695 = vunpack.c.l.b16 %v648
      %v696 = vunpack.c.h.b16 %v648
      %v697 = vunpack.c.l.b16 %v649
      %v698 = vunpack.c.h.b16 %v649
      %v699 = vunpack.c.l.b16 %v650
      %v700 = vunpack.c.h.b16 %v650
      %v701 = vunpack.c.l.b16 %v651
      %v702 = vunpack.c.h.b16 %v651
      %v703 = vunpack.c.l.b16 %v652
      %v704 = vunpack.c.h.b16 %v652
      %v705 = vunpack.c.l.b16 %v653
      %v706 = vunpack.c.h.b16 %v653
      %v707 = vunpack.c.l.b16 %v654
      %v708 = vunpack.c.h.b16 %v654
      %v709 = vunpack.c.l.b16 %v655
      %v710 = vunpack.c.h.b16 %v655
      %v711 = vunpack.c.l.b16 %v656
      %v712 = vunpack.c.h.b16 %v656
      %v713 = vunpack.c.l.b16 %v657
      %v714 = vunpack.c.h.b16 %v657
      %v715 = vunpack.c.l.b16 %v658
      %v716 = vunpack.c.h.b16 %v658
      %v717 = vunpack.c.l.b16 %v659
      %v718 = vunpack.c.h.b16 %v659
      %v719 = vunpack.c.l.b16 %v660
      %v720 = vunpack.c.h.b16 %v660
      %v721 = vpack.c.b16 %v687, %v685
      %v722 = vpack.c.b16 %v688, %v686
      %v723 = vpack.c.b16 %v691, %v689
      %v724 = vpack.c.b16 %v692, %v690
      %v725 = vpack.c.b16 %v695, %v693
      %v726 = vpack.c.b16 %v696, %v694
      %v727 = vpack.c.b16 %v699, %v697
      %v728 = vpack.c.b16 %v700, %v698
      %v729 = vpack.c.b16 %v703, %v701
      %v730 = vpack.c.b16 %v704, %v702
      %v731 = vpack.c.b16 %v707, %v705
      %v732 = vpack.c.b16 %v708, %v706
      %v733 = vpack.c.b16 %v711, %v709
      %v734 = vpack.c.b16 %v712, %v710
      %v735 = vpack.c.b16 %v715, %v713
      %v736 = vpack.c.b16 %v716, %v714
      %v737 = vpack.c.b16 %v719, %v717
      %v738 = vpack.c.b16 %v720, %v718
      %vm757 = vcmask 130048
      %v759 = vsel %vm757, %v665, 0
      %761 = vmatprep.subr.bf16.mxu0 %v736
      %762 = vmatpush1.bf16.msra.mxu0 %v735
      %763 = vmatprep.subr.bf16.mxu0 %v734
      %764 = vmatpush1.bf16.msra.mxu0 %v733
      %765 = vmatprep.subr.bf16.mxu0 %v732
      %766 = vmatpush1.bf16.msra.mxu0 %v731
      %767 = vmatprep.subr.bf16.mxu0 %v730
      %768 = vmatpush1.bf16.msra.mxu0 %v729
      %769 = vmatprep.subr.bf16.mxu0 %v728
      %770 = vmatpush1.bf16.msra.mxu0 %v727
      %771 = vmatprep.subr.bf16.mxu0 %v726
      %772 = vmatpush1.bf16.msra.mxu0 %v725
      %773 = vmatprep.subr.bf16.mxu0 %v724
      %774 = vmatpush1.bf16.msra.mxu0 %v723
      %775 = vmatprep.subr.bf16.mxu0 %v722
      %776 = vmatpush1.bf16.msra.mxu0 %v721
      %777 = vmatprep.subr.bf16.mxu0 0
      %778 = vmatpush2.bf16.msra.mxu0 0
      %779 = vmatprep.subr.bf16.mxu0 0
      %780 = vmatpush2.bf16.msra.mxu0 0
      %781 = vmatprep.subr.bf16.mxu0 0
      %782 = vmatpush2.bf16.msra.mxu0 0
      %783 = vmatprep.subr.bf16.mxu0 0
      %784 = vmatpush2.bf16.msra.mxu0 0
      %785 = vmatprep.subr.bf16.mxu0 0
      %786 = vmatpush2.bf16.msra.mxu0 0
      %787 = vmatprep.subr.bf16.mxu0 0
      %788 = vmatpush2.bf16.msra.mxu0 0
      %789 = vmatprep.subr.bf16.mxu0 0
      %790 = vmatpush2.bf16.msra.mxu0 0
      %791 = vmatprep.subr.bf16.mxu0 %v738
      %792 = vmatpush2.bf16.msra.mxu0 %v737
      %793 = vmatprep.mubr.bf16.mxu0 %v759
      %794 = vmatmul.mubr.bf16.gmra.mxu0 %v664
      %v795 = vpop.f32.mrf.mxu0
      %v796 = vadd.f32 0.0, %v795
      %v797 = vpop.f32.mrf.mxu0
      %v798 = vadd.f32 0.0, %v797
      %v799 = vpop.f32.mrf.mxu0
      %v800 = vpop.f32.mrf.mxu0
      %801 = vdwg.mxu0
      %802 = vst [vmem:[%s258] sm:$0xff] %v796
      %803 = vst [vmem:[%s258 + $0x8] sm:$0xff] %v798
      %v804 = vadd.f32 %v796, %v798
      %805 = vadd.xlane.f32.xlu0 %v804
      %v806 = vpop.xlane.xlu0 %805
      %v807 = vmul.f32 %v796, %v796
      %v808 = vmul.f32 %v798, %v798
      %v809 = vadd.f32 %v807, %v808
      %810 = vadd.xlane.f32.xlu0 %v809
      %v811 = vpop.xlane.xlu0 %810
      %vm812 = vcmask 7168
      %v813 = vsel %vm812, %v806, %v811
      %v814 = vadd.f32 %v813, 0.0
      %vm815 = vcmask 15360
      %816 = vst.msk [vmem:[%s262] sm:$0xff] %vm815, %v814
      %p817 = scmp.lt.s32.totalorder %s18, 1
      %s818 = scalar_select %p817, %s18, 1
      %s819 = smul.addr %s818, 2
      %s820 = smul.addr %s819, 8
      %s821 = scalar_lea.vmem %s5, %s820
      %p822 = scmp.lt.s32.totalorder %s18, 1
      %s823 = scalar_select %p822, %s18, 1
      %s824 = smul.addr %s823, 8
      %s825 = scalar_lea.vmem %s6, %s824
      // Predicated region
      $region41: #{resblock_forward.4} parent=39 // pred_check
        %p826 = pneg %p146
      $region42: #{resblock_forward.4} parent=39 // pred_check_branch
        %828 = sbr.rel (%p826) target = $region44
      $region43: #{resblock_forward.4} parent=39 // pred_region
        _
      $region44: #{resblock_forward.4} parent=39 // pred_fallthru
        _
      // Predicated region
      $region45: #{resblock_forward.4} parent=39 // pred_check
        %p829 = pneg %p172
      $region46: #{resblock_forward.4} parent=39 // pred_check_branch
        %831 = sbr.rel (%p829) target = $region48
      $region47: #{resblock_forward.4} parent=39 // pred_region
        _
      $region48: #{resblock_forward.4} parent=39 // pred_fallthru
        _
    $region40: #{resblock_forward.4} parent=5 // pred_fallthru
      _
    %p832 = scmp.le.s32.totalorder 2, %s13
    // Predicated region
    $region49: #{resblock_forward.4} parent=5 // pred_check
      %p833 = pneg %p832
    $region50: #{resblock_forward.4} parent=5 // pred_check_branch
      %835 = sbr.rel (%p833) target = $region52
    $region51: #{resblock_forward.4} parent=5 // pred_region
      %s836 = ssub.s32 %s13, 2
      // Predicated region
      $region53: #{resblock_forward.4} parent=51 // pred_check
        %p837 = pneg %p152
      $region54: #{resblock_forward.4} parent=51 // pred_check_branch
        %839 = sbr.rel (%p837) target = $region56
      $region55: #{resblock_forward.4} parent=51 // pred_region
        %p840 = scmp.lt.s32.totalorder %s19, 1
        %s841 = scalar_select %p840, %s19, 1
        %s842 = smul.addr %s841, 2
        %s843 = smul.addr %s842, 8
        %s844 = scalar_lea.vmem %s5, %s843
      $region56: #{resblock_forward.4} parent=51 // pred_fallthru
        _
      // Predicated region
      $region57: #{resblock_forward.4} parent=51 // pred_check
        %p845 = pneg %p178
      $region58: #{resblock_forward.4} parent=51 // pred_check_branch
        %847 = sbr.rel (%p845) target = $region60
      $region59: #{resblock_forward.4} parent=51 // pred_region
        %p848 = scmp.lt.s32.totalorder %s19, 1
        %s849 = scalar_select %p848, %s19, 1
        %s850 = smul.addr %s849, 8
        %s851 = scalar_lea.vmem %s6, %s850
      $region60: #{resblock_forward.4} parent=51 // pred_fallthru
        _
    $region52: #{resblock_forward.4} parent=5 // pred_fallthru
      _
  $region6: #{resblock_forward.4} parent=0 // loop_footer
    %s17 = sadd.s32 1, %s13
  $region7: #{resblock_forward.4} parent=0 // loop_footer_branch
    %12 = sbr.rel target = $region3
  $region8: #{resblock_forward.4} parent=0 // loop_exit
    _

</llo_original>
